<compile_context>
chip_gen: v7x
topology: tpu7x:2x2x1
jax: 0.10.0
libtpu: 0.0.40
codegen_flags: <defaults>
</compile_context>

<pallas_src>
import jax
import jax.numpy as jnp
from jax.experimental import pallas as pl
from jax.experimental.pallas import tpu as pltpu

LANES = 128          # TPU lane width (last-dim tile)
SUBLANES = 8         # f32 sublane tile
BN_EPS = 1e-5
MAX_BM = 1024        # batch-tile cap (rows)


def _round_up(x, m):
    return (x + m - 1) // m * m


def _num_tensorcores_per_chip():
    """2 TensorCores on v7x, 1 on v5e/v6e (default 1 if undetectable)."""
    try:
        kind = jax.devices()[0].device_kind.lower()
    except Exception:
        return 1
    return 2 if "7" in kind else 1


# ---------------------------------------------------------------------------
# Kernel: whole 5-layer MLP fused into one pallas_call body.
#   (bf16 matmul -> f32 bias (BN folded) -> ReLU -> bf16 carry) x4
#   -> bf16 matmul + f32 bias  (lane-dense padded output)
# ---------------------------------------------------------------------------
def _mlp_kernel(x_ref, w1_ref, wmid_ref, chid_ref, w5_ref, c5_ref, o_ref):
    c_hid = chid_ref[...]                                   # (4, H) f32, tiny

    # Layer 1: K stays at the true input_dim (no K-padding to 128).
    z = jnp.dot(x_ref[...].astype(jnp.bfloat16), w1_ref[...],
                preferred_element_type=jnp.float32)
    h = jnp.maximum(z + c_hid[0][None, :], 0.0).astype(jnp.bfloat16)

    # Layers 2..4: statically unrolled over the stacked (3, H, H) weights.
    for k in range(3):
        z = jnp.dot(h, wmid_ref[k], preferred_element_type=jnp.float32)
        h = jnp.maximum(z + c_hid[k + 1][None, :], 0.0).astype(jnp.bfloat16)

    # Layer 5: no activation; f32 epilogue, lane-dense padded output.
    out = jnp.dot(h, w5_ref[...], preferred_element_type=jnp.float32) + c5_ref[...]
    o_ref[...] = out.astype(o_ref.dtype)


# ---------------------------------------------------------------------------
# Parameter preparation: fold BN into Linear, cast weights to bf16, stack the
# hidden weights/biases into single operands, pad the final layer to a
# lane-dense (…, 128k) output.
# ---------------------------------------------------------------------------
def prepare_params(raw, eps=BN_EPS):
    folded_w, folded_c = [], []
    for i in range(1, 5):
        w, b = raw[f"w{i}"], raw[f"b{i}"]
        scale = raw[f"gamma{i}"] / jnp.sqrt(raw[f"var{i}"] + eps)
        shift = raw[f"beta{i}"] - raw[f"mean{i}"] * scale
        folded_w.append((w * scale[None, :]).astype(jnp.bfloat16))
        folded_c.append((b * scale + shift).astype(jnp.float32))

    w5, b5 = raw["w5"], raw["b5"]
    out_dim = w5.shape[1]
    out_pad = LANES * pl.cdiv(out_dim, LANES)
    pad = out_pad - out_dim
    return {
        "w1": folded_w[0],                                        # (in, H) bf16
        "w_mid": jnp.stack(folded_w[1:4]),                        # (3, H, H) bf16
        "c_hid": jnp.stack(folded_c),                             # (4, H) f32
        "w5": jnp.pad(w5, ((0, 0), (0, pad))).astype(jnp.bfloat16),            # (H, out_pad)
        "c5": jnp.pad(b5, ((0, pad),)).astype(jnp.float32).reshape(1, -1),      # (1, out_pad)
        "out_dim": out_dim,
        "out_pad": out_pad,
    }


def _pick_block_batch(batch, requested=None, num_tc=1):
    if requested is not None:
        return max(SUBLANES, _round_up(requested, SUBLANES))
    bp8 = max(SUBLANES, _round_up(batch, SUBLANES))
    if num_tc <= 1:
        # Single TensorCore (v5e/v6e): every extra grid step is pure serial
        # overhead -> one step whenever the tile fits under the cap.
        return bp8 if bp8 <= MAX_BM else MAX_BM
    # Dual TensorCore (v7x): even number of grid steps so "parallel" sheds
    # work onto both cores.
    steps = max(2, 2 * pl.cdiv(bp8, 2 * MAX_BM))
    return max(SUBLANES, _round_up(pl.cdiv(bp8, steps), SUBLANES))


def _invariant_spec(arr):
    """Grid-invariant operand: same block every step, single-buffered."""
    zeros = (0,) * arr.ndim
    return pl.BlockSpec(arr.shape, lambda i, z=zeros: z,
                        pipeline_mode=pl.Buffered(1))


# ---------------------------------------------------------------------------
# Wrapper
# ---------------------------------------------------------------------------
def q_forward(x, prep, *, block_batch=None):
    """Eval-mode QNetwork forward.  x: [B, input_dim] f32 -> [B, output_dim]."""
    B, in_dim = x.shape
    out_dim, out_pad = prep["out_dim"], prep["out_pad"]

    bm = _pick_block_batch(B, block_batch, _num_tensorcores_per_chip())
    Bp = _round_up(B, bm)
    xp = x if Bp == B else jnp.pad(x, ((0, Bp - B), (0, 0)))
    grid = (Bp // bm,)

    params = (prep["w1"], prep["w_mid"], prep["c_hid"], prep["w5"], prep["c5"])
    in_specs = [pl.BlockSpec((bm, in_dim), lambda i: (i, 0))]
    in_specs += [_invariant_spec(p) for p in params]

    out = pl.pallas_call(
        _mlp_kernel,
        out_shape=jax.ShapeDtypeStruct((Bp, out_pad), jnp.float32),
        grid_spec=pltpu.PrefetchScalarGridSpec(
            num_scalar_prefetch=0,
            grid=grid,
            in_specs=in_specs,
            out_specs=pl.BlockSpec((bm, out_pad), lambda i: (i, 0)),
        ),
        compiler_params=pltpu.CompilerParams(
            dimension_semantics=("parallel",)),
    )(xp, *params)

    return out[:B, :out_dim]


# ---------------------------------------------------------------------------
# Deterministic synthetic params matching the QNetwork parameter shapes
# (Linear weights/biases + BatchNorm gamma/beta/running_mean/running_var).
# ---------------------------------------------------------------------------
def init_params(key, input_dim, hidden_dim, output_dim):
    ks = iter(jax.random.split(key, 16))

    def linear(k, fi, fo):
        bound = 1.0 / (fi ** 0.5)
        kw, kb = jax.random.split(k)
        w = jax.random.uniform(kw, (fi, fo), jnp.float32, -bound, bound)
        b = jax.random.uniform(kb, (fo,), jnp.float32, -bound, bound)
        return w, b

    def bn(k, dim):
        kg, kb, km, kv = jax.random.split(k, 4)
        gamma = 1.0 + 0.1 * jax.random.normal(kg, (dim,), jnp.float32)
        beta = 0.1 * jax.random.normal(kb, (dim,), jnp.float32)
        mean = 0.1 * jax.random.normal(km, (dim,), jnp.float32)
        var = jnp.abs(jax.random.normal(kv, (dim,), jnp.float32)) + 0.5
        return gamma, beta, mean, var

    p = {}
    dims = [(input_dim, hidden_dim), (hidden_dim, hidden_dim),
            (hidden_dim, hidden_dim), (hidden_dim, hidden_dim)]
    for idx, (fi, fo) in enumerate(dims, start=1):
        w, b = linear(next(ks), fi, fo)
        g, be, m, v = bn(next(ks), fo)
        p[f"w{idx}"], p[f"b{idx}"] = w, b
        p[f"gamma{idx}"], p[f"beta{idx}"] = g, be
        p[f"mean{idx}"], p[f"var{idx}"] = m, v
    p["w5"], p["b5"] = linear(next(ks), hidden_dim, output_dim)
    return p


def _reference_f32(x, raw, eps=BN_EPS):
    """Pure-f32 eval-mode reference (Linear -> BN(running stats) -> ReLU)."""
    h = x
    for i in range(1, 5):
        z = h @ raw[f"w{i}"] + raw[f"b{i}"]
        z = (z - raw[f"mean{i}"]) / jnp.sqrt(raw[f"var{i}"] + eps)
        z = z * raw[f"gamma{i}"] + raw[f"beta{i}"]
        h = jnp.maximum(z, 0.0)
    return h @ raw["w5"] + raw["b5"]


def _reference_matched(x, prep):
    """Plain-JAX reference following the kernel's exact precision path."""
    c_hid = prep["c_hid"]
    z = jnp.dot(x.astype(jnp.bfloat16), prep["w1"],
                preferred_element_type=jnp.float32)
    h = jnp.maximum(z + c_hid[0][None, :], 0.0).astype(jnp.bfloat16)
    for k in range(3):
        z = jnp.dot(h, prep["w_mid"][k], preferred_element_type=jnp.float32)
        h = jnp.maximum(z + c_hid[k + 1][None, :], 0.0).astype(jnp.bfloat16)
    out = jnp.dot(h, prep["w5"], preferred_element_type=jnp.float32) + prep["c5"]
    return out[:, :prep["out_dim"]]


if __name__ == "__main__":
    # Small shapes consistent with the module (hidden_dim is fixed at 128 in
    # Q; CartPole-like env).  Batch chosen non-divisible by 8 to exercise the
    # padded path (250 -> 256 rows; grid=1 on v5e/v6e, grid=2 on v7x).
    batch, input_dim, hidden_dim, output_dim = 250, 8, 128, 4

    key = jax.random.PRNGKey(0)
    kx, kp = jax.random.split(key)
    x = jax.random.normal(kx, (batch, input_dim), jnp.float32)

    raw = init_params(kp, input_dim, hidden_dim, output_dim)
    prep = prepare_params(raw)

    out = q_forward(x, prep)
    out = jax.block_until_ready(out)
    assert out.shape == (batch, output_dim)

    # Correctness: tight vs a plain-JAX reference that follows the kernel's
    # exact bf16/f32 precision path; loose sanity vs the pure-f32 reference
    # (bf16 operands accumulate rounding error through 5 layers).
    matched = _reference_matched(x, prep)
    ref = _reference_f32(x, raw)
    err_matched = float(jnp.max(jnp.abs(out - matched)))
    err_f32 = float(jnp.max(jnp.abs(out - ref)))
    assert jnp.allclose(out, matched, atol=2e-2, rtol=2e-2), err_matched
    assert jnp.allclose(out, ref, atol=5e-1, rtol=5e-1), err_f32

    # greedy action (argmax over Q-values) — plain JAX glue, like Q.greedy_a
    _ = jnp.argmax(out, axis=1)

    print("KERNEL_OK")
</pallas_src>

<mosaic_0001>
module attributes {stable_mosaic.version = 11 : i64} {
  func.func @_mlp_kernel(%arg0: i32, %arg1: memref<256x8xf32, #tpu.memory_space<vmem>>, %arg2: memref<8x128xbf16, #tpu.memory_space<vmem>>, %arg3: memref<3x128x128xbf16, #tpu.memory_space<vmem>>, %arg4: memref<4x128xf32, #tpu.memory_space<vmem>>, %arg5: memref<128x128xbf16, #tpu.memory_space<vmem>>, %arg6: memref<1x128xf32, #tpu.memory_space<vmem>>, %arg7: memref<256x128xf32, #tpu.memory_space<vmem>>) attributes {dimension_semantics = [#tpu.dimension_semantics<parallel>], iteration_bounds = array<i64: 1>, scalar_prefetch = 0 : i64, scratch_operands = 0 : i64, tpu.core_type = #tpu.core_type<tc>, window_params = [{transform_indices = @transform_0, window_bounds = array<i64: 256, 8>}, {pipeline_mode = #tpu.pipeline_mode<synchronous>, transform_indices = @transform_1, window_bounds = array<i64: 8, 128>}, {pipeline_mode = #tpu.pipeline_mode<synchronous>, transform_indices = @transform_2, window_bounds = array<i64: 3, 128, 128>}, {pipeline_mode = #tpu.pipeline_mode<synchronous>, transform_indices = @transform_3, window_bounds = array<i64: 4, 128>}, {pipeline_mode = #tpu.pipeline_mode<synchronous>, transform_indices = @transform_4, window_bounds = array<i64: 128, 128>}, {pipeline_mode = #tpu.pipeline_mode<synchronous>, transform_indices = @transform_5, window_bounds = array<i64: 1, 128>}, {transform_indices = @transform_6, window_bounds = array<i64: 256, 128>}]} {
    %c0 = arith.constant 0 : index
    %c0_0 = arith.constant 0 : index
    %0 = vector.load %arg4[%c0, %c0_0] : memref<4x128xf32, #tpu.memory_space<vmem>>, vector<4x128xf32>
    %c0_1 = arith.constant 0 : index
    %c0_2 = arith.constant 0 : index
    %1 = vector.load %arg1[%c0_1, %c0_2] : memref<256x8xf32, #tpu.memory_space<vmem>>, vector<256x8xf32>
    %2 = arith.truncf %1 : vector<256x8xf32> to vector<256x8xbf16>
    %c0_3 = arith.constant 0 : index
    %c0_4 = arith.constant 0 : index
    %3 = vector.load %arg2[%c0_3, %c0_4] : memref<8x128xbf16, #tpu.memory_space<vmem>>, vector<8x128xbf16>
    %cst = arith.constant dense<0.000000e+00> : vector<256x128xf32>
    %4 = tpu.matmul %2, %3, %cst {dimension_numbers = #tpu.dot_dimension_numbers<[1], [0], [0], [1], [0, 0, 1, 1], [], []>} : vector<256x8xbf16>, vector<8x128xbf16>, vector<256x128xf32> -> vector<256x128xf32>
    %5 = vector.extract_strided_slice %0 {offsets = [0, 0], sizes = [1, 128], strides = [1, 1]} : vector<4x128xf32> to vector<1x128xf32>
    %6 = vector.shape_cast %5 : vector<1x128xf32> to vector<128xf32>
    %7 = vector.shape_cast %6 : vector<128xf32> to vector<1x128xf32>
    %8 = vector.broadcast %7 : vector<1x128xf32> to vector<256x128xf32>
    %9 = arith.addf %4, %8 : vector<256x128xf32>
    %cst_5 = arith.constant 0.000000e+00 : f32
    %10 = vector.broadcast %cst_5 : f32 to vector<256x128xf32>
    %11 = arith.maximumf %9, %10 : vector<256x128xf32>
    %12 = arith.truncf %11 : vector<256x128xf32> to vector<256x128xbf16>
    %c0_6 = arith.constant 0 : index
    %c0_7 = arith.constant 0 : index
    %c0_8 = arith.constant 0 : index
    %13 = vector.load %arg3[%c0_6, %c0_7, %c0_8] : memref<3x128x128xbf16, #tpu.memory_space<vmem>>, vector<1x128x128xbf16>
    %14 = vector.shape_cast %13 : vector<1x128x128xbf16> to vector<128x128xbf16>
    %cst_9 = arith.constant dense<0.000000e+00> : vector<256x128xf32>
    %15 = tpu.matmul %12, %14, %cst_9 {dimension_numbers = #tpu.dot_dimension_numbers<[1], [0], [0], [1], [0, 0, 1, 1], [], []>} : vector<256x128xbf16>, vector<128x128xbf16>, vector<256x128xf32> -> vector<256x128xf32>
    %16 = vector.extract_strided_slice %0 {offsets = [1, 0], sizes = [1, 128], strides = [1, 1]} : vector<4x128xf32> to vector<1x128xf32>
    %17 = vector.shape_cast %16 : vector<1x128xf32> to vector<128xf32>
    %18 = vector.shape_cast %17 : vector<128xf32> to vector<1x128xf32>
    %19 = vector.broadcast %18 : vector<1x128xf32> to vector<256x128xf32>
    %20 = arith.addf %15, %19 : vector<256x128xf32>
    %cst_10 = arith.constant 0.000000e+00 : f32
    %21 = vector.broadcast %cst_10 : f32 to vector<256x128xf32>
    %22 = arith.maximumf %20, %21 : vector<256x128xf32>
    %23 = arith.truncf %22 : vector<256x128xf32> to vector<256x128xbf16>
    %c1 = arith.constant 1 : index
    %c0_11 = arith.constant 0 : index
    %c0_12 = arith.constant 0 : index
    %24 = vector.load %arg3[%c1, %c0_11, %c0_12] : memref<3x128x128xbf16, #tpu.memory_space<vmem>>, vector<1x128x128xbf16>
    %25 = vector.shape_cast %24 : vector<1x128x128xbf16> to vector<128x128xbf16>
    %cst_13 = arith.constant dense<0.000000e+00> : vector<256x128xf32>
    %26 = tpu.matmul %23, %25, %cst_13 {dimension_numbers = #tpu.dot_dimension_numbers<[1], [0], [0], [1], [0, 0, 1, 1], [], []>} : vector<256x128xbf16>, vector<128x128xbf16>, vector<256x128xf32> -> vector<256x128xf32>
    %27 = vector.extract_strided_slice %0 {offsets = [2, 0], sizes = [1, 128], strides = [1, 1]} : vector<4x128xf32> to vector<1x128xf32>
    %28 = vector.shape_cast %27 : vector<1x128xf32> to vector<128xf32>
    %29 = vector.shape_cast %28 : vector<128xf32> to vector<1x128xf32>
    %30 = vector.broadcast %29 : vector<1x128xf32> to vector<256x128xf32>
    %31 = arith.addf %26, %30 : vector<256x128xf32>
    %cst_14 = arith.constant 0.000000e+00 : f32
    %32 = vector.broadcast %cst_14 : f32 to vector<256x128xf32>
    %33 = arith.maximumf %31, %32 : vector<256x128xf32>
    %34 = arith.truncf %33 : vector<256x128xf32> to vector<256x128xbf16>
    %c2 = arith.constant 2 : index
    %c0_15 = arith.constant 0 : index
    %c0_16 = arith.constant 0 : index
    %35 = vector.load %arg3[%c2, %c0_15, %c0_16] : memref<3x128x128xbf16, #tpu.memory_space<vmem>>, vector<1x128x128xbf16>
    %36 = vector.shape_cast %35 : vector<1x128x128xbf16> to vector<128x128xbf16>
    %cst_17 = arith.constant dense<0.000000e+00> : vector<256x128xf32>
    %37 = tpu.matmul %34, %36, %cst_17 {dimension_numbers = #tpu.dot_dimension_numbers<[1], [0], [0], [1], [0, 0, 1, 1], [], []>} : vector<256x128xbf16>, vector<128x128xbf16>, vector<256x128xf32> -> vector<256x128xf32>
    %38 = vector.extract_strided_slice %0 {offsets = [3, 0], sizes = [1, 128], strides = [1, 1]} : vector<4x128xf32> to vector<1x128xf32>
    %39 = vector.shape_cast %38 : vector<1x128xf32> to vector<128xf32>
    %40 = vector.shape_cast %39 : vector<128xf32> to vector<1x128xf32>
    %41 = vector.broadcast %40 : vector<1x128xf32> to vector<256x128xf32>
    %42 = arith.addf %37, %41 : vector<256x128xf32>
    %cst_18 = arith.constant 0.000000e+00 : f32
    %43 = vector.broadcast %cst_18 : f32 to vector<256x128xf32>
    %44 = arith.maximumf %42, %43 : vector<256x128xf32>
    %45 = arith.truncf %44 : vector<256x128xf32> to vector<256x128xbf16>
    %c0_19 = arith.constant 0 : index
    %c0_20 = arith.constant 0 : index
    %46 = vector.load %arg5[%c0_19, %c0_20] : memref<128x128xbf16, #tpu.memory_space<vmem>>, vector<128x128xbf16>
    %cst_21 = arith.constant dense<0.000000e+00> : vector<256x128xf32>
    %47 = tpu.matmul %45, %46, %cst_21 {dimension_numbers = #tpu.dot_dimension_numbers<[1], [0], [0], [1], [0, 0, 1, 1], [], []>} : vector<256x128xbf16>, vector<128x128xbf16>, vector<256x128xf32> -> vector<256x128xf32>
    %c0_22 = arith.constant 0 : index
    %c0_23 = arith.constant 0 : index
    %48 = vector.load %arg6[%c0_22, %c0_23] : memref<1x128xf32, #tpu.memory_space<vmem>>, vector<1x128xf32>
    %49 = vector.broadcast %48 : vector<1x128xf32> to vector<256x128xf32>
    %50 = arith.addf %47, %49 : vector<256x128xf32>
    %c0_24 = arith.constant 0 : index
    %c0_25 = arith.constant 0 : index
    %51 = vector.load %arg7[%c0_24, %c0_25] : memref<256x128xf32, #tpu.memory_space<vmem>>, vector<256x128xf32>
    tpu.vector_store %arg7[%c0_24, %c0_25], %50 {strides = array<i32>} : memref<256x128xf32, #tpu.memory_space<vmem>>, vector<256x128xf32>,
    return
  }
  func.func @transform_0(%arg0: i32) -> (i32, i32) {
    %c0_i32 = arith.constant 0 : i32
    %c0_i32_0 = arith.constant 0 : i32
    return %arg0, %c0_i32 : i32, i32
  }
  func.func @transform_1(%arg0: i32) -> (i32, i32) {
    %c0_i32 = arith.constant 0 : i32
    %c0_i32_0 = arith.constant 0 : i32
    %c0_i32_1 = arith.constant 0 : i32
    return %c0_i32, %c0_i32_0 : i32, i32
  }
  func.func @transform_2(%arg0: i32) -> (i32, i32, i32) {
    %c0_i32 = arith.constant 0 : i32
    %c0_i32_0 = arith.constant 0 : i32
    %c0_i32_1 = arith.constant 0 : i32
    %c0_i32_2 = arith.constant 0 : i32
    return %c0_i32, %c0_i32_0, %c0_i32_1 : i32, i32, i32
  }
  func.func @transform_3(%arg0: i32) -> (i32, i32) {
    %c0_i32 = arith.constant 0 : i32
    %c0_i32_0 = arith.constant 0 : i32
    %c0_i32_1 = arith.constant 0 : i32
    return %c0_i32, %c0_i32_0 : i32, i32
  }
  func.func @transform_4(%arg0: i32) -> (i32, i32) {
    %c0_i32 = arith.constant 0 : i32
    %c0_i32_0 = arith.constant 0 : i32
    %c0_i32_1 = arith.constant 0 : i32
    return %c0_i32, %c0_i32_0 : i32, i32
  }
  func.func @transform_5(%arg0: i32) -> (i32, i32) {
    %c0_i32 = arith.constant 0 : i32
    %c0_i32_0 = arith.constant 0 : i32
    %c0_i32_1 = arith.constant 0 : i32
    return %c0_i32, %c0_i32_0 : i32, i32
  }
  func.func @transform_6(%arg0: i32) -> (i32, i32) {
    %c0_i32 = arith.constant 0 : i32
    %c0_i32_0 = arith.constant 0 : i32
    return %arg0, %c0_i32 : i32, i32
  }
}

</mosaic_0001>

<llo_original>
// kernel: tpu_custom_call.1
$region0: #{tpu_custom_call.1}
  #allocation0 [shape = 'u32[]', space=smem, size = 0x4, offset = 0x4, fixed_abs, tag = 'smem constant byte address 0x4 - core index']
  #allocation1 [shape = 'u32[144,128]{1,0:T(1,128)}', space=vmem, size = 0x12000, scoped, tag = 'internal scratch']
  %s0 = inlined_call_operand.vmem [shape: f32[256,8], index: 0, kind: input, shape index: {}]
  %s1 = inlined_call_operand.vmem [shape: bf16[8,128], index: 1, kind: input, shape index: {}]
  %s2 = inlined_call_operand.vmem [shape: bf16[3,128,128], index: 2, kind: input, shape index: {}]
  %s3 = inlined_call_operand.vmem [shape: f32[4,128], index: 3, kind: input, shape index: {}]
  %s4 = inlined_call_operand.vmem [shape: bf16[128,128], index: 4, kind: input, shape index: {}]
  %s5 = inlined_call_operand.vmem [shape: f32[1,128], index: 5, kind: input, shape index: {}]
  %s6 = inlined_call_operand.hbm [shape: f32[256,128], index: 6, kind: output, shape index: {}]
  %s7 = sld [smem:[#allocation0]]
  $region34: #{tpu_custom_call.1} parent=0
    _
  %s9 = ssub.s32 1, %s7
  %s10 = scalar_select 0, %s9, %s7
  $region1: #{tpu_custom_call.1} parent=0
    #allocation2 [shape = 'u8[131072]{0}', space=vmem, size = 0x20000, scoped, tag = 'output window, operand 0, single buffered']
    #allocation3 [shape = 's32[1]{0}', space=sflag, size = 0x4, scoped, tag = 'scoped memory for tpu_custom_call.1']
    %11 = vsyncpa [#allocation3], 0
    // Predicated region
    $region2: #{tpu_custom_call.1} parent=1 // pred_check
      _
    $region3: #{tpu_custom_call.1} parent=1 // pred_check_branch
      %13 = sbr.rel (0) target = $region5
    $region4: #{tpu_custom_call.1} parent=1 // pred_region
      _
    $region5: #{tpu_custom_call.1} parent=1 // pred_fallthru
      _
    // Predicated region
    $region6: #{tpu_custom_call.1} parent=1 // pred_check
      _
    $region7: #{tpu_custom_call.1} parent=1 // pred_check_branch
      %15 = sbr.rel (0) target = $region9
    $region8: #{tpu_custom_call.1} parent=1 // pred_region
      _
    $region9: #{tpu_custom_call.1} parent=1 // pred_fallthru
      _
    // Predicated region
    $region10: #{tpu_custom_call.1} parent=1 // pred_check
      _
    $region11: #{tpu_custom_call.1} parent=1 // pred_check_branch
      %17 = sbr.rel (0) target = $region13
    $region12: #{tpu_custom_call.1} parent=1 // pred_region
      _
    $region13: #{tpu_custom_call.1} parent=1 // pred_fallthru
      _
    // Predicated region
    $region14: #{tpu_custom_call.1} parent=1 // pred_check
      _
    $region15: #{tpu_custom_call.1} parent=1 // pred_check_branch
      %19 = sbr.rel (0) target = $region17
    $region16: #{tpu_custom_call.1} parent=1 // pred_region
      _
    $region17: #{tpu_custom_call.1} parent=1 // pred_fallthru
      _
    // Predicated region
    $region18: #{tpu_custom_call.1} parent=1 // pred_check
      _
    $region19: #{tpu_custom_call.1} parent=1 // pred_check_branch
      %21 = sbr.rel (0) target = $region21
    $region20: #{tpu_custom_call.1} parent=1 // pred_region
      _
    $region21: #{tpu_custom_call.1} parent=1 // pred_fallthru
      _
    // Predicated region
    $region22: #{tpu_custom_call.1} parent=1 // pred_check
      _
    $region23: #{tpu_custom_call.1} parent=1 // pred_check_branch
      %23 = sbr.rel (0) target = $region25
    $region24: #{tpu_custom_call.1} parent=1 // pred_region
      _
    $region25: #{tpu_custom_call.1} parent=1 // pred_fallthru
      _
    %v25 = vld [vmem:[%s3] sm:$0xf]
    %v26 = vld [vmem:[%s0] sm:$0xff]
    %v27 = vld [vmem:[%s0 + $0x8] sm:$0xff]
    %v28 = vld [vmem:[%s0 + $0x10] sm:$0xff]
    %v29 = vld [vmem:[%s0 + $0x18] sm:$0xff]
    %v30 = vld [vmem:[%s0 + $0x20] sm:$0xff]
    %v31 = vld [vmem:[%s0 + $0x28] sm:$0xff]
    %v32 = vld [vmem:[%s0 + $0x30] sm:$0xff]
    %v33 = vld [vmem:[%s0 + $0x38] sm:$0xff]
    %v34 = vld [vmem:[%s0 + $0x40] sm:$0xff]
    %v35 = vld [vmem:[%s0 + $0x48] sm:$0xff]
    %v36 = vld [vmem:[%s0 + $0x50] sm:$0xff]
    %v37 = vld [vmem:[%s0 + $0x58] sm:$0xff]
    %v38 = vld [vmem:[%s0 + $0x60] sm:$0xff]
    %v39 = vld [vmem:[%s0 + $0x68] sm:$0xff]
    %v40 = vld [vmem:[%s0 + $0x70] sm:$0xff]
    %v41 = vld [vmem:[%s0 + $0x78] sm:$0xff]
    %v42 = vld [vmem:[%s0 + $0x80] sm:$0xff]
    %v43 = vld [vmem:[%s0 + $0x88] sm:$0xff]
    %v44 = vld [vmem:[%s0 + $0x90] sm:$0xff]
    %v45 = vld [vmem:[%s0 + $0x98] sm:$0xff]
    %v46 = vld [vmem:[%s0 + $0xa0] sm:$0xff]
    %v47 = vld [vmem:[%s0 + $0xa8] sm:$0xff]
    %v48 = vld [vmem:[%s0 + $0xb0] sm:$0xff]
    %v49 = vld [vmem:[%s0 + $0xb8] sm:$0xff]
    %v50 = vld [vmem:[%s0 + $0xc0] sm:$0xff]
    %v51 = vld [vmem:[%s0 + $0xc8] sm:$0xff]
    %v52 = vld [vmem:[%s0 + $0xd0] sm:$0xff]
    %v53 = vld [vmem:[%s0 + $0xd8] sm:$0xff]
    %v54 = vld [vmem:[%s0 + $0xe0] sm:$0xff]
    %v55 = vld [vmem:[%s0 + $0xe8] sm:$0xff]
    %v56 = vld [vmem:[%s0 + $0xf0] sm:$0xff]
    %v57 = vld [vmem:[%s0 + $0xf8] sm:$0xff]
    %v58 = vpack.c.bf16 %v27, %v26
    %v59 = vpack.c.bf16 %v29, %v28
    %v60 = vpack.c.bf16 %v31, %v30
    %v61 = vpack.c.bf16 %v33, %v32
    %v62 = vpack.c.bf16 %v35, %v34
    %v63 = vpack.c.bf16 %v37, %v36
    %v64 = vpack.c.bf16 %v39, %v38
    %v65 = vpack.c.bf16 %v41, %v40
    %v66 = vpack.c.bf16 %v43, %v42
    %v67 = vpack.c.bf16 %v45, %v44
    %v68 = vpack.c.bf16 %v47, %v46
    %v69 = vpack.c.bf16 %v49, %v48
    %v70 = vpack.c.bf16 %v51, %v50
    %v71 = vpack.c.bf16 %v53, %v52
    %v72 = vpack.c.bf16 %v55, %v54
    %v73 = vpack.c.bf16 %v57, %v56
    %v74 = vld [vmem:[%s1] sm:$0xf]
    %v75 = vlaneseq
    %v76 = vshrl.u32 %v75, 7
    %v77 = vsub.s32 0, %v76
    %v78 = vrot.slane %v25, %v77
    %vm79 = vcmask 64512
    %v81 = vsel %vm79, %v58, 0
    %v84 = vsel %vm79, %v59, 0
    %v87 = vsel %vm79, %v60, 0
    %v90 = vsel %vm79, %v61, 0
    %v93 = vsel %vm79, %v62, 0
    %v96 = vsel %vm79, %v63, 0
    %v99 = vsel %vm79, %v64, 0
    %v102 = vsel %vm79, %v65, 0
    %v105 = vsel %vm79, %v66, 0
    %v108 = vsel %vm79, %v67, 0
    %v111 = vsel %vm79, %v68, 0
    %v114 = vsel %vm79, %v69, 0
    %v117 = vsel %vm79, %v70, 0
    %v120 = vsel %vm79, %v71, 0
    %v123 = vsel %vm79, %v72, 0
    %v126 = vsel %vm79, %v73, 0
    %vm128 = vcmask 1043456
    %v130 = vsel %vm128, %v74, 0
    %132 = vmatprep.subr.bf16.mxu0 0
    %133 = vmatpush1.bf16.msra.mxu0 %v130
    %134 = vmatprep.subr.bf16.mxu0 0
    %135 = vmatpush1.bf16.msra.mxu0 0
    %136 = vmatprep.subr.bf16.mxu0 0
    %137 = vmatpush1.bf16.msra.mxu0 0
    %138 = vmatprep.subr.bf16.mxu0 0
    %139 = vmatpush1.bf16.msra.mxu0 0
    %140 = vmatprep.subr.bf16.mxu0 0
    %141 = vmatpush1.bf16.msra.mxu0 0
    %142 = vmatprep.subr.bf16.mxu0 0
    %143 = vmatpush1.bf16.msra.mxu0 0
    %144 = vmatprep.subr.bf16.mxu0 0
    %145 = vmatpush1.bf16.msra.mxu0 0
    %146 = vmatprep.subr.bf16.mxu0 0
    %147 = vmatpush1.bf16.msra.mxu0 0
    %148 = vmatprep.subr.bf16.mxu0 0
    %149 = vmatpush1.bf16.msra.mxu0 0
    %150 = vmatprep.subr.bf16.mxu0 0
    %151 = vmatpush1.bf16.msra.mxu0 0
    %152 = vmatprep.subr.bf16.mxu0 0
    %153 = vmatpush1.bf16.msra.mxu0 0
    %154 = vmatprep.subr.bf16.mxu0 0
    %155 = vmatpush1.bf16.msra.mxu0 0
    %156 = vmatprep.subr.bf16.mxu0 0
    %157 = vmatpush1.bf16.msra.mxu0 0
    %158 = vmatprep.subr.bf16.mxu0 0
    %159 = vmatpush1.bf16.msra.mxu0 0
    %160 = vmatprep.subr.bf16.mxu0 0
    %161 = vmatpush1.bf16.msra.mxu0 0
    %162 = vmatprep.subr.bf16.mxu0 0
    %163 = vmatpush1.bf16.msra.mxu0 0
    %164 = vmatprep.mubr.bf16.mxu0 0
    %165 = vmatmul.mubr.bf16.gmra.mrb[0].mxu0 %v81
    %v166 = vpop.f32.mrb[0].mxu0
    %v167 = vadd.f32 %v78, %v166
    %v168 = vpop.f32.mrb[0].mxu0
    %v169 = vpop.f32.mrb[0].mxu0
    %v170 = vadd.f32 %v78, %v169
    %v171 = vpop.f32.mrb[0].mxu0
    %172 = vmatprep.mubr.bf16.mxu0 0
    %173 = vmatmul.mubr.bf16.gmra.mrb[0].mxu0 %v84
    %v174 = vpop.f32.mrb[0].mxu0
    %v175 = vadd.f32 %v78, %v174
    %v176 = vpop.f32.mrb[0].mxu0
    %v177 = vpop.f32.mrb[0].mxu0
    %v178 = vadd.f32 %v78, %v177
    %v179 = vpop.f32.mrb[0].mxu0
    %180 = vmatprep.mubr.bf16.mxu0 0
    %181 = vmatmul.mubr.bf16.gmra.mrb[0].mxu0 %v87
    %v182 = vpop.f32.mrb[0].mxu0
    %v183 = vadd.f32 %v78, %v182
    %v184 = vpop.f32.mrb[0].mxu0
    %v185 = vpop.f32.mrb[0].mxu0
    %v186 = vadd.f32 %v78, %v185
    %v187 = vpop.f32.mrb[0].mxu0
    %188 = vmatprep.mubr.bf16.mxu0 0
    %189 = vmatmul.mubr.bf16.gmra.mrb[0].mxu0 %v90
    %v190 = vpop.f32.mrb[0].mxu0
    %v191 = vadd.f32 %v78, %v190
    %v192 = vpop.f32.mrb[0].mxu0
    %v193 = vpop.f32.mrb[0].mxu0
    %v194 = vadd.f32 %v78, %v193
    %v195 = vpop.f32.mrb[0].mxu0
    %196 = vmatprep.mubr.bf16.mxu0 0
    %197 = vmatmul.mubr.bf16.gmra.mrb[0].mxu0 %v93
    %v198 = vpop.f32.mrb[0].mxu0
    %v199 = vadd.f32 %v78, %v198
    %v200 = vpop.f32.mrb[0].mxu0
    %v201 = vpop.f32.mrb[0].mxu0
    %v202 = vadd.f32 %v78, %v201
    %v203 = vpop.f32.mrb[0].mxu0
    %204 = vmatprep.mubr.bf16.mxu0 0
    %205 = vmatmul.mubr.bf16.gmra.mrb[0].mxu0 %v96
    %v206 = vpop.f32.mrb[0].mxu0
    %v207 = vadd.f32 %v78, %v206
    %v208 = vpop.f32.mrb[0].mxu0
    %v209 = vpop.f32.mrb[0].mxu0
    %v210 = vadd.f32 %v78, %v209
    %v211 = vpop.f32.mrb[0].mxu0
    %212 = vmatprep.mubr.bf16.mxu0 0
    %213 = vmatmul.mubr.bf16.gmra.mrb[0].mxu0 %v99
    %v214 = vpop.f32.mrb[0].mxu0
    %v215 = vadd.f32 %v78, %v214
    %v216 = vpop.f32.mrb[0].mxu0
    %v217 = vpop.f32.mrb[0].mxu0
    %v218 = vadd.f32 %v78, %v217
    %v219 = vpop.f32.mrb[0].mxu0
    %220 = vmatprep.mubr.bf16.mxu0 0
    %221 = vmatmul.mubr.bf16.gmra.mrb[0].mxu0 %v102
    %v222 = vpop.f32.mrb[0].mxu0
    %v223 = vadd.f32 %v78, %v222
    %v224 = vpop.f32.mrb[0].mxu0
    %v225 = vpop.f32.mrb[0].mxu0
    %v226 = vadd.f32 %v78, %v225
    %v227 = vpop.f32.mrb[0].mxu0
    %228 = vmatprep.mubr.bf16.mxu0 0
    %229 = vmatmul.mubr.bf16.gmra.mrb[0].mxu0 %v105
    %v230 = vpop.f32.mrb[0].mxu0
    %v231 = vadd.f32 %v78, %v230
    %v232 = vpop.f32.mrb[0].mxu0
    %v233 = vpop.f32.mrb[0].mxu0
    %v234 = vadd.f32 %v78, %v233
    %v235 = vpop.f32.mrb[0].mxu0
    %236 = vmatprep.mubr.bf16.mxu0 0
    %237 = vmatmul.mubr.bf16.gmra.mrb[0].mxu0 %v108
    %v238 = vpop.f32.mrb[0].mxu0
    %v239 = vadd.f32 %v78, %v238
    %v240 = vpop.f32.mrb[0].mxu0
    %v241 = vpop.f32.mrb[0].mxu0
    %v242 = vadd.f32 %v78, %v241
    %v243 = vpop.f32.mrb[0].mxu0
    %244 = vmatprep.mubr.bf16.mxu0 0
    %245 = vmatmul.mubr.bf16.gmra.mrb[0].mxu0 %v111
    %v246 = vpop.f32.mrb[0].mxu0
    %v247 = vadd.f32 %v78, %v246
    %v248 = vpop.f32.mrb[0].mxu0
    %v249 = vpop.f32.mrb[0].mxu0
    %v250 = vadd.f32 %v78, %v249
    %v251 = vpop.f32.mrb[0].mxu0
    %252 = vmatprep.mubr.bf16.mxu0 0
    %253 = vmatmul.mubr.bf16.gmra.mrb[0].mxu0 %v114
    %v254 = vpop.f32.mrb[0].mxu0
    %v255 = vadd.f32 %v78, %v254
    %v256 = vpop.f32.mrb[0].mxu0
    %v257 = vpop.f32.mrb[0].mxu0
    %v258 = vadd.f32 %v78, %v257
    %v259 = vpop.f32.mrb[0].mxu0
    %260 = vmatprep.mubr.bf16.mxu0 0
    %261 = vmatmul.mubr.bf16.gmra.mrb[0].mxu0 %v117
    %v262 = vpop.f32.mrb[0].mxu0
    %v263 = vadd.f32 %v78, %v262
    %v264 = vpop.f32.mrb[0].mxu0
    %v265 = vpop.f32.mrb[0].mxu0
    %v266 = vadd.f32 %v78, %v265
    %v267 = vpop.f32.mrb[0].mxu0
    %268 = vmatprep.mubr.bf16.mxu0 0
    %269 = vmatmul.mubr.bf16.gmra.mrb[0].mxu0 %v120
    %v270 = vpop.f32.mrb[0].mxu0
    %v271 = vadd.f32 %v78, %v270
    %v272 = vpop.f32.mrb[0].mxu0
    %v273 = vpop.f32.mrb[0].mxu0
    %v274 = vadd.f32 %v78, %v273
    %v275 = vpop.f32.mrb[0].mxu0
    %276 = vmatprep.mubr.bf16.mxu0 0
    %277 = vmatmul.mubr.bf16.gmra.mrb[0].mxu0 %v123
    %v278 = vpop.f32.mrb[0].mxu0
    %v279 = vadd.f32 %v78, %v278
    %v280 = vpop.f32.mrb[0].mxu0
    %v281 = vpop.f32.mrb[0].mxu0
    %v282 = vadd.f32 %v78, %v281
    %v283 = vpop.f32.mrb[0].mxu0
    %284 = vmatprep.mubr.bf16.mxu0 0
    %285 = vmatmul.mubr.bf16.gmra.mrb[0].mxu0 %v126
    %v286 = vpop.f32.mrb[0].mxu0
    %v287 = vadd.f32 %v78, %v286
    %v288 = vpop.f32.mrb[0].mxu0
    %v289 = vpop.f32.mrb[0].mxu0
    %v290 = vadd.f32 %v78, %v289
    %v291 = vpop.f32.mrb[0].mxu0
    %292 = vdwg.mxu0
    %v293 = vmax.f32 %v167, 0.0
    %v294 = vmax.f32 %v170, 0.0
    %v295 = vmax.f32 %v175, 0.0
    %v296 = vmax.f32 %v178, 0.0
    %v297 = vmax.f32 %v183, 0.0
    %v298 = vmax.f32 %v186, 0.0
    %v299 = vmax.f32 %v191, 0.0
    %v300 = vmax.f32 %v194, 0.0
    %v301 = vmax.f32 %v199, 0.0
    %v302 = vmax.f32 %v202, 0.0
    %v303 = vmax.f32 %v207, 0.0
    %v304 = vmax.f32 %v210, 0.0
    %v305 = vmax.f32 %v215, 0.0
    %v306 = vmax.f32 %v218, 0.0
    %v307 = vmax.f32 %v223, 0.0
    %v308 = vmax.f32 %v226, 0.0
    %v309 = vmax.f32 %v231, 0.0
    %v310 = vmax.f32 %v234, 0.0
    %v311 = vmax.f32 %v239, 0.0
    %v312 = vmax.f32 %v242, 0.0
    %v313 = vmax.f32 %v247, 0.0
    %v314 = vmax.f32 %v250, 0.0
    %v315 = vmax.f32 %v255, 0.0
    %v316 = vmax.f32 %v258, 0.0
    %v317 = vmax.f32 %v263, 0.0
    %v318 = vmax.f32 %v266, 0.0
    %v319 = vmax.f32 %v271, 0.0
    %v320 = vmax.f32 %v274, 0.0
    %v321 = vmax.f32 %v279, 0.0
    %v322 = vmax.f32 %v282, 0.0
    %v323 = vmax.f32 %v287, 0.0
    %v324 = vmax.f32 %v290, 0.0
    %v325 = vpack.c.bf16 %v294, %v293
    %v326 = vpack.c.bf16 %v296, %v295
    %v327 = vpack.c.bf16 %v298, %v297
    %v328 = vpack.c.bf16 %v300, %v299
    %v329 = vpack.c.bf16 %v302, %v301
    %v330 = vpack.c.bf16 %v304, %v303
    %v331 = vpack.c.bf16 %v306, %v305
    %v332 = vpack.c.bf16 %v308, %v307
    %v333 = vpack.c.bf16 %v310, %v309
    %v334 = vpack.c.bf16 %v312, %v311
    %v335 = vpack.c.bf16 %v314, %v313
    %v336 = vpack.c.bf16 %v316, %v315
    %v337 = vpack.c.bf16 %v318, %v317
    %v338 = vpack.c.bf16 %v320, %v319
    %v339 = vpack.c.bf16 %v322, %v321
    %v340 = vpack.c.bf16 %v324, %v323
    %v341 = vld [vmem:[%s2] sm:$0xf]
    %v342 = vld [vmem:[%s2 + $0x4] sm:$0xf]
    %v343 = vld [vmem:[%s2 + $0x8] sm:$0xf]
    %v344 = vld [vmem:[%s2 + $0xc] sm:$0xf]
    %v345 = vld [vmem:[%s2 + $0x10] sm:$0xf]
    %v346 = vld [vmem:[%s2 + $0x14] sm:$0xf]
    %v347 = vld [vmem:[%s2 + $0x18] sm:$0xf]
    %v348 = vld [vmem:[%s2 + $0x1c] sm:$0xf]
    %v349 = vld [vmem:[%s2 + $0x20] sm:$0xf]
    %v350 = vld [vmem:[%s2 + $0x24] sm:$0xf]
    %v351 = vld [vmem:[%s2 + $0x28] sm:$0xf]
    %v352 = vld [vmem:[%s2 + $0x2c] sm:$0xf]
    %v353 = vld [vmem:[%s2 + $0x30] sm:$0xf]
    %v354 = vld [vmem:[%s2 + $0x34] sm:$0xf]
    %v355 = vld [vmem:[%s2 + $0x38] sm:$0xf]
    %v356 = vld [vmem:[%s2 + $0x3c] sm:$0xf]
    %v357 = vlaneseq
    %v358 = vshrl.u32 %v357, 7
    %v359 = vsub.s32 1, %v358
    %v360 = vrot.slane %v25, %v359
    %v377 = vunpack.c.l.b16 %v341
    %v378 = vunpack.c.l.b16 %v342
    %v379 = vunpack.c.l.b16 %v343
    %v380 = vunpack.c.l.b16 %v344
    %v381 = vunpack.c.l.b16 %v345
    %v382 = vunpack.c.l.b16 %v346
    %v383 = vunpack.c.l.b16 %v347
    %v384 = vunpack.c.l.b16 %v348
    %v385 = vunpack.c.l.b16 %v349
    %v386 = vunpack.c.l.b16 %v350
    %v387 = vunpack.c.l.b16 %v351
    %v388 = vunpack.c.l.b16 %v352
    %v389 = vunpack.c.l.b16 %v353
    %v390 = vunpack.c.l.b16 %v354
    %v391 = vunpack.c.l.b16 %v355
    %v392 = vunpack.c.l.b16 %v356
    %v393 = vpack.c.b16 %v378, %v377
    %v394 = vpack.c.b16 %v380, %v379
    %v395 = vpack.c.b16 %v382, %v381
    %v396 = vpack.c.b16 %v384, %v383
    %v397 = vpack.c.b16 %v386, %v385
    %v398 = vpack.c.b16 %v388, %v387
    %v399 = vpack.c.b16 %v390, %v389
    %v400 = vpack.c.b16 %v392, %v391
    %409 = vmatprep.subr.bf16.mxu0 0
    %410 = vmatpush1.bf16.msra.mxu0 %v393
    %411 = vmatprep.subr.bf16.mxu0 0
    %412 = vmatpush1.bf16.msra.mxu0 %v394
    %413 = vmatprep.subr.bf16.mxu0 0
    %414 = vmatpush1.bf16.msra.mxu0 %v395
    %415 = vmatprep.subr.bf16.mxu0 0
    %416 = vmatpush1.bf16.msra.mxu0 %v396
    %417 = vmatprep.subr.bf16.mxu0 0
    %418 = vmatpush1.bf16.msra.mxu0 %v397
    %419 = vmatprep.subr.bf16.mxu0 0
    %420 = vmatpush1.bf16.msra.mxu0 %v398
    %421 = vmatprep.subr.bf16.mxu0 0
    %422 = vmatpush1.bf16.msra.mxu0 %v399
    %423 = vmatprep.subr.bf16.mxu0 0
    %424 = vmatpush1.bf16.msra.mxu0 %v400
    %425 = vmatprep.subr.bf16.mxu0 0
    %426 = vmatpush1.bf16.msra.mxu0 0
    %427 = vmatprep.subr.bf16.mxu0 0
    %428 = vmatpush1.bf16.msra.mxu0 0
    %429 = vmatprep.subr.bf16.mxu0 0
    %430 = vmatpush1.bf16.msra.mxu0 0
    %431 = vmatprep.subr.bf16.mxu0 0
    %432 = vmatpush1.bf16.msra.mxu0 0
    %433 = vmatprep.subr.bf16.mxu0 0
    %434 = vmatpush1.bf16.msra.mxu0 0
    %435 = vmatprep.subr.bf16.mxu0 0
    %436 = vmatpush1.bf16.msra.mxu0 0
    %437 = vmatprep.subr.bf16.mxu0 0
    %438 = vmatpush1.bf16.msra.mxu0 0
    %439 = vmatprep.subr.bf16.mxu0 0
    %440 = vmatpush1.bf16.msra.mxu0 0
    %441 = vmatprep.mubr.bf16.mxu0 0
    %442 = vmatmul.mubr.bf16.gmra.mrb[0].mxu0 %v325
    %v443 = vpop.f32.mrb[0].mxu0
    %v444 = vadd.f32 %v360, %v443
    %v445 = vpop.f32.mrb[0].mxu0
    %v446 = vpop.f32.mrb[0].mxu0
    %v447 = vadd.f32 %v360, %v446
    %v448 = vpop.f32.mrb[0].mxu0
    %449 = vmatprep.mubr.bf16.mxu0 0
    %450 = vmatmul.mubr.bf16.gmra.mrb[0].mxu0 %v326
    %v451 = vpop.f32.mrb[0].mxu0
    %v452 = vadd.f32 %v360, %v451
    %v453 = vpop.f32.mrb[0].mxu0
    %v454 = vpop.f32.mrb[0].mxu0
    %v455 = vadd.f32 %v360, %v454
    %v456 = vpop.f32.mrb[0].mxu0
    %457 = vmatprep.mubr.bf16.mxu0 0
    %458 = vmatmul.mubr.bf16.gmra.mrb[0].mxu0 %v327
    %v459 = vpop.f32.mrb[0].mxu0
    %v460 = vadd.f32 %v360, %v459
    %v461 = vpop.f32.mrb[0].mxu0
    %v462 = vpop.f32.mrb[0].mxu0
    %v463 = vadd.f32 %v360, %v462
    %v464 = vpop.f32.mrb[0].mxu0
    %465 = vmatprep.mubr.bf16.mxu0 0
    %466 = vmatmul.mubr.bf16.gmra.mrb[0].mxu0 %v328
    %v467 = vpop.f32.mrb[0].mxu0
    %v468 = vadd.f32 %v360, %v467
    %v469 = vpop.f32.mrb[0].mxu0
    %v470 = vpop.f32.mrb[0].mxu0
    %v471 = vadd.f32 %v360, %v470
    %v472 = vpop.f32.mrb[0].mxu0
    %473 = vmatprep.mubr.bf16.mxu0 0
    %474 = vmatmul.mubr.bf16.gmra.mrb[0].mxu0 %v329
    %v475 = vpop.f32.mrb[0].mxu0
    %v476 = vadd.f32 %v360, %v475
    %v477 = vpop.f32.mrb[0].mxu0
    %v478 = vpop.f32.mrb[0].mxu0
    %v479 = vadd.f32 %v360, %v478
    %v480 = vpop.f32.mrb[0].mxu0
    %481 = vmatprep.mubr.bf16.mxu0 0
    %482 = vmatmul.mubr.bf16.gmra.mrb[0].mxu0 %v330
    %v483 = vpop.f32.mrb[0].mxu0
    %v484 = vadd.f32 %v360, %v483
    %v485 = vpop.f32.mrb[0].mxu0
    %v486 = vpop.f32.mrb[0].mxu0
    %v487 = vadd.f32 %v360, %v486
    %v488 = vpop.f32.mrb[0].mxu0
    %489 = vmatprep.mubr.bf16.mxu0 0
    %490 = vmatmul.mubr.bf16.gmra.mrb[0].mxu0 %v331
    %v491 = vpop.f32.mrb[0].mxu0
    %v492 = vadd.f32 %v360, %v491
    %v493 = vpop.f32.mrb[0].mxu0
    %v494 = vpop.f32.mrb[0].mxu0
    %v495 = vadd.f32 %v360, %v494
    %v496 = vpop.f32.mrb[0].mxu0
    %497 = vmatprep.mubr.bf16.mxu0 0
    %498 = vmatmul.mubr.bf16.gmra.mrb[0].mxu0 %v332
    %v499 = vpop.f32.mrb[0].mxu0
    %v500 = vadd.f32 %v360, %v499
    %v501 = vpop.f32.mrb[0].mxu0
    %v502 = vpop.f32.mrb[0].mxu0
    %v503 = vadd.f32 %v360, %v502
    %v504 = vpop.f32.mrb[0].mxu0
    %505 = vmatprep.mubr.bf16.mxu0 0
    %506 = vmatmul.mubr.bf16.gmra.mrb[0].mxu0 %v333
    %v507 = vpop.f32.mrb[0].mxu0
    %v508 = vadd.f32 %v360, %v507
    %v509 = vpop.f32.mrb[0].mxu0
    %v510 = vpop.f32.mrb[0].mxu0
    %v511 = vadd.f32 %v360, %v510
    %v512 = vpop.f32.mrb[0].mxu0
    %513 = vmatprep.mubr.bf16.mxu0 0
    %514 = vmatmul.mubr.bf16.gmra.mrb[0].mxu0 %v334
    %v515 = vpop.f32.mrb[0].mxu0
    %v516 = vadd.f32 %v360, %v515
    %v517 = vpop.f32.mrb[0].mxu0
    %v518 = vpop.f32.mrb[0].mxu0
    %v519 = vadd.f32 %v360, %v518
    %v520 = vpop.f32.mrb[0].mxu0
    %521 = vmatprep.mubr.bf16.mxu0 0
    %522 = vmatmul.mubr.bf16.gmra.mrb[0].mxu0 %v335
    %v523 = vpop.f32.mrb[0].mxu0
    %v524 = vadd.f32 %v360, %v523
    %v525 = vpop.f32.mrb[0].mxu0
    %v526 = vpop.f32.mrb[0].mxu0
    %v527 = vadd.f32 %v360, %v526
    %v528 = vpop.f32.mrb[0].mxu0
    %529 = vmatprep.mubr.bf16.mxu0 0
    %530 = vmatmul.mubr.bf16.gmra.mrb[0].mxu0 %v336
    %v531 = vpop.f32.mrb[0].mxu0
    %v532 = vadd.f32 %v360, %v531
    %v533 = vpop.f32.mrb[0].mxu0
    %v534 = vpop.f32.mrb[0].mxu0
    %v535 = vadd.f32 %v360, %v534
    %v536 = vpop.f32.mrb[0].mxu0
    %537 = vmatprep.mubr.bf16.mxu0 0
    %538 = vmatmul.mubr.bf16.gmra.mrb[0].mxu0 %v337
    %v539 = vpop.f32.mrb[0].mxu0
    %v540 = vadd.f32 %v360, %v539
    %v541 = vpop.f32.mrb[0].mxu0
    %v542 = vpop.f32.mrb[0].mxu0
    %v543 = vadd.f32 %v360, %v542
    %v544 = vpop.f32.mrb[0].mxu0
    %545 = vmatprep.mubr.bf16.mxu0 0
    %546 = vmatmul.mubr.bf16.gmra.mrb[0].mxu0 %v338
    %v547 = vpop.f32.mrb[0].mxu0
    %v548 = vadd.f32 %v360, %v547
    %v549 = vpop.f32.mrb[0].mxu0
    %v550 = vpop.f32.mrb[0].mxu0
    %v551 = vadd.f32 %v360, %v550
    %v552 = vpop.f32.mrb[0].mxu0
    %553 = vmatprep.mubr.bf16.mxu0 0
    %554 = vmatmul.mubr.bf16.gmra.mrb[0].mxu0 %v339
    %v555 = vpop.f32.mrb[0].mxu0
    %v556 = vadd.f32 %v360, %v555
    %v557 = vpop.f32.mrb[0].mxu0
    %v558 = vpop.f32.mrb[0].mxu0
    %v559 = vadd.f32 %v360, %v558
    %v560 = vpop.f32.mrb[0].mxu0
    %561 = vmatprep.mubr.bf16.mxu0 0
    %562 = vmatmul.mubr.bf16.gmra.mrb[0].mxu0 %v340
    %v563 = vpop.f32.mrb[0].mxu0
    %v564 = vadd.f32 %v360, %v563
    %v565 = vpop.f32.mrb[0].mxu0
    %v566 = vpop.f32.mrb[0].mxu0
    %v567 = vadd.f32 %v360, %v566
    %v568 = vpop.f32.mrb[0].mxu0
    %569 = vdwg.mxu0
    %v570 = vmax.f32 %v444, 0.0
    %v571 = vmax.f32 %v447, 0.0
    %v572 = vmax.f32 %v452, 0.0
    %v573 = vmax.f32 %v455, 0.0
    %v574 = vmax.f32 %v460, 0.0
    %v575 = vmax.f32 %v463, 0.0
    %v576 = vmax.f32 %v468, 0.0
    %v577 = vmax.f32 %v471, 0.0
    %v578 = vmax.f32 %v476, 0.0
    %v579 = vmax.f32 %v479, 0.0
    %v580 = vmax.f32 %v484, 0.0
    %v581 = vmax.f32 %v487, 0.0
    %v582 = vmax.f32 %v492, 0.0
    %v583 = vmax.f32 %v495, 0.0
    %v584 = vmax.f32 %v500, 0.0
    %v585 = vmax.f32 %v503, 0.0
    %v586 = vmax.f32 %v508, 0.0
    %v587 = vmax.f32 %v511, 0.0
    %v588 = vmax.f32 %v516, 0.0
    %v589 = vmax.f32 %v519, 0.0
    %v590 = vmax.f32 %v524, 0.0
    %v591 = vmax.f32 %v527, 0.0
    %v592 = vmax.f32 %v532, 0.0
    %v593 = vmax.f32 %v535, 0.0
    %v594 = vmax.f32 %v540, 0.0
    %v595 = vmax.f32 %v543, 0.0
    %v596 = vmax.f32 %v548, 0.0
    %v597 = vmax.f32 %v551, 0.0
    %v598 = vmax.f32 %v556, 0.0
    %v599 = vmax.f32 %v559, 0.0
    %v600 = vmax.f32 %v564, 0.0
    %v601 = vmax.f32 %v567, 0.0
    %v602 = vpack.c.bf16 %v571, %v570
    %v603 = vpack.c.bf16 %v573, %v572
    %v604 = vpack.c.bf16 %v575, %v574
    %v605 = vpack.c.bf16 %v577, %v576
    %v606 = vpack.c.bf16 %v579, %v578
    %v607 = vpack.c.bf16 %v581, %v580
    %v608 = vpack.c.bf16 %v583, %v582
    %v609 = vpack.c.bf16 %v585, %v584
    %v610 = vpack.c.bf16 %v587, %v586
    %v611 = vpack.c.bf16 %v589, %v588
    %v612 = vpack.c.bf16 %v591, %v590
    %v613 = vpack.c.bf16 %v593, %v592
    %v614 = vpack.c.bf16 %v595, %v594
    %v615 = vpack.c.bf16 %v597, %v596
    %v616 = vpack.c.bf16 %v599, %v598
    %v617 = vpack.c.bf16 %v601, %v600
    %s618 = scalar_lea.vmem %s2, 64
    %v619 = vld [vmem:[%s618] sm:$0xf]
    %v620 = vld [vmem:[%s618 + $0x4] sm:$0xf]
    %v621 = vld [vmem:[%s618 + $0x8] sm:$0xf]
    %v622 = vld [vmem:[%s618 + $0xc] sm:$0xf]
    %v623 = vld [vmem:[%s618 + $0x10] sm:$0xf]
    %v624 = vld [vmem:[%s618 + $0x14] sm:$0xf]
    %v625 = vld [vmem:[%s618 + $0x18] sm:$0xf]
    %v626 = vld [vmem:[%s618 + $0x1c] sm:$0xf]
    %v627 = vld [vmem:[%s618 + $0x20] sm:$0xf]
    %v628 = vld [vmem:[%s618 + $0x24] sm:$0xf]
    %v629 = vld [vmem:[%s618 + $0x28] sm:$0xf]
    %v630 = vld [vmem:[%s618 + $0x2c] sm:$0xf]
    %v631 = vld [vmem:[%s618 + $0x30] sm:$0xf]
    %v632 = vld [vmem:[%s618 + $0x34] sm:$0xf]
    %v633 = vld [vmem:[%s618 + $0x38] sm:$0xf]
    %v634 = vld [vmem:[%s618 + $0x3c] sm:$0xf]
    %v635 = vlaneseq
    %v636 = vshrl.u32 %v635, 7
    %v637 = vsub.s32 2, %v636
    %v638 = vrot.slane %v25, %v637
    %v655 = vunpack.c.l.b16 %v619
    %v656 = vunpack.c.l.b16 %v620
    %v657 = vunpack.c.l.b16 %v621
    %v658 = vunpack.c.l.b16 %v622
    %v659 = vunpack.c.l.b16 %v623
    %v660 = vunpack.c.l.b16 %v624
    %v661 = vunpack.c.l.b16 %v625
    %v662 = vunpack.c.l.b16 %v626
    %v663 = vunpack.c.l.b16 %v627
    %v664 = vunpack.c.l.b16 %v628
    %v665 = vunpack.c.l.b16 %v629
    %v666 = vunpack.c.l.b16 %v630
    %v667 = vunpack.c.l.b16 %v631
    %v668 = vunpack.c.l.b16 %v632
    %v669 = vunpack.c.l.b16 %v633
    %v670 = vunpack.c.l.b16 %v634
    %v671 = vpack.c.b16 %v656, %v655
    %v672 = vpack.c.b16 %v658, %v657
    %v673 = vpack.c.b16 %v660, %v659
    %v674 = vpack.c.b16 %v662, %v661
    %v675 = vpack.c.b16 %v664, %v663
    %v676 = vpack.c.b16 %v666, %v665
    %v677 = vpack.c.b16 %v668, %v667
    %v678 = vpack.c.b16 %v670, %v669
    %687 = vmatprep.subr.bf16.mxu0 0
    %688 = vmatpush1.bf16.msra.mxu0 %v671
    %689 = vmatprep.subr.bf16.mxu0 0
    %690 = vmatpush1.bf16.msra.mxu0 %v672
    %691 = vmatprep.subr.bf16.mxu0 0
    %692 = vmatpush1.bf16.msra.mxu0 %v673
    %693 = vmatprep.subr.bf16.mxu0 0
    %694 = vmatpush1.bf16.msra.mxu0 %v674
    %695 = vmatprep.subr.bf16.mxu0 0
    %696 = vmatpush1.bf16.msra.mxu0 %v675
    %697 = vmatprep.subr.bf16.mxu0 0
    %698 = vmatpush1.bf16.msra.mxu0 %v676
    %699 = vmatprep.subr.bf16.mxu0 0
    %700 = vmatpush1.bf16.msra.mxu0 %v677
    %701 = vmatprep.subr.bf16.mxu0 0
    %702 = vmatpush1.bf16.msra.mxu0 %v678
    %703 = vmatprep.subr.bf16.mxu0 0
    %704 = vmatpush1.bf16.msra.mxu0 0
    %705 = vmatprep.subr.bf16.mxu0 0
    %706 = vmatpush1.bf16.msra.mxu0 0
    %707 = vmatprep.subr.bf16.mxu0 0
    %708 = vmatpush1.bf16.msra.mxu0 0
    %709 = vmatprep.subr.bf16.mxu0 0
    %710 = vmatpush1.bf16.msra.mxu0 0
    %711 = vmatprep.subr.bf16.mxu0 0
    %712 = vmatpush1.bf16.msra.mxu0 0
    %713 = vmatprep.subr.bf16.mxu0 0
    %714 = vmatpush1.bf16.msra.mxu0 0
    %715 = vmatprep.subr.bf16.mxu0 0
    %716 = vmatpush1.bf16.msra.mxu0 0
    %717 = vmatprep.subr.bf16.mxu0 0
    %718 = vmatpush1.bf16.msra.mxu0 0
    %719 = vmatprep.mubr.bf16.mxu0 0
    %720 = vmatmul.mubr.bf16.gmra.mrb[0].mxu0 %v602
    %v721 = vpop.f32.mrb[0].mxu0
    %v722 = vadd.f32 %v638, %v721
    %v723 = vpop.f32.mrb[0].mxu0
    %v724 = vpop.f32.mrb[0].mxu0
    %v725 = vadd.f32 %v638, %v724
    %v726 = vpop.f32.mrb[0].mxu0
    %727 = vmatprep.mubr.bf16.mxu0 0
    %728 = vmatmul.mubr.bf16.gmra.mrb[0].mxu0 %v603
    %v729 = vpop.f32.mrb[0].mxu0
    %v730 = vadd.f32 %v638, %v729
    %v731 = vpop.f32.mrb[0].mxu0
    %v732 = vpop.f32.mrb[0].mxu0
    %v733 = vadd.f32 %v638, %v732
    %v734 = vpop.f32.mrb[0].mxu0
    %735 = vmatprep.mubr.bf16.mxu0 0
    %736 = vmatmul.mubr.bf16.gmra.mrb[0].mxu0 %v604
    %v737 = vpop.f32.mrb[0].mxu0
    %v738 = vadd.f32 %v638, %v737
    %v739 = vpop.f32.mrb[0].mxu0
    %v740 = vpop.f32.mrb[0].mxu0
    %v741 = vadd.f32 %v638, %v740
    %v742 = vpop.f32.mrb[0].mxu0
    %743 = vmatprep.mubr.bf16.mxu0 0
    %744 = vmatmul.mubr.bf16.gmra.mrb[0].mxu0 %v605
    %v745 = vpop.f32.mrb[0].mxu0
    %v746 = vadd.f32 %v638, %v745
    %v747 = vpop.f32.mrb[0].mxu0
    %v748 = vpop.f32.mrb[0].mxu0
    %v749 = vadd.f32 %v638, %v748
    %v750 = vpop.f32.mrb[0].mxu0
    %751 = vmatprep.mubr.bf16.mxu0 0
    %752 = vmatmul.mubr.bf16.gmra.mrb[0].mxu0 %v606
    %v753 = vpop.f32.mrb[0].mxu0
    %v754 = vadd.f32 %v638, %v753
    %v755 = vpop.f32.mrb[0].mxu0
    %v756 = vpop.f32.mrb[0].mxu0
    %v757 = vadd.f32 %v638, %v756
    %v758 = vpop.f32.mrb[0].mxu0
    %759 = vmatprep.mubr.bf16.mxu0 0
    %760 = vmatmul.mubr.bf16.gmra.mrb[0].mxu0 %v607
    %v761 = vpop.f32.mrb[0].mxu0
    %v762 = vadd.f32 %v638, %v761
    %v763 = vpop.f32.mrb[0].mxu0
    %v764 = vpop.f32.mrb[0].mxu0
    %v765 = vadd.f32 %v638, %v764
    %v766 = vpop.f32.mrb[0].mxu0
    %767 = vmatprep.mubr.bf16.mxu0 0
    %768 = vmatmul.mubr.bf16.gmra.mrb[0].mxu0 %v608
    %v769 = vpop.f32.mrb[0].mxu0
    %v770 = vadd.f32 %v638, %v769
    %v771 = vpop.f32.mrb[0].mxu0
    %v772 = vpop.f32.mrb[0].mxu0
    %v773 = vadd.f32 %v638, %v772
    %v774 = vpop.f32.mrb[0].mxu0
    %775 = vmatprep.mubr.bf16.mxu0 0
    %776 = vmatmul.mubr.bf16.gmra.mrb[0].mxu0 %v609
    %v777 = vpop.f32.mrb[0].mxu0
    %v778 = vadd.f32 %v638, %v777
    %v779 = vpop.f32.mrb[0].mxu0
    %v780 = vpop.f32.mrb[0].mxu0
    %v781 = vadd.f32 %v638, %v780
    %v782 = vpop.f32.mrb[0].mxu0
    %783 = vmatprep.mubr.bf16.mxu0 0
    %784 = vmatmul.mubr.bf16.gmra.mrb[0].mxu0 %v610
    %v785 = vpop.f32.mrb[0].mxu0
    %v786 = vadd.f32 %v638, %v785
    %v787 = vpop.f32.mrb[0].mxu0
    %v788 = vpop.f32.mrb[0].mxu0
    %v789 = vadd.f32 %v638, %v788
    %v790 = vpop.f32.mrb[0].mxu0
    %791 = vmatprep.mubr.bf16.mxu0 0
    %792 = vmatmul.mubr.bf16.gmra.mrb[0].mxu0 %v611
    %v793 = vpop.f32.mrb[0].mxu0
    %v794 = vadd.f32 %v638, %v793
    %v795 = vpop.f32.mrb[0].mxu0
    %v796 = vpop.f32.mrb[0].mxu0
    %v797 = vadd.f32 %v638, %v796
    %v798 = vpop.f32.mrb[0].mxu0
    %799 = vmatprep.mubr.bf16.mxu0 0
    %800 = vmatmul.mubr.bf16.gmra.mrb[0].mxu0 %v612
    %v801 = vpop.f32.mrb[0].mxu0
    %v802 = vadd.f32 %v638, %v801
    %v803 = vpop.f32.mrb[0].mxu0
    %v804 = vpop.f32.mrb[0].mxu0
    %v805 = vadd.f32 %v638, %v804
    %v806 = vpop.f32.mrb[0].mxu0
    %807 = vmatprep.mubr.bf16.mxu0 0
    %808 = vmatmul.mubr.bf16.gmra.mrb[0].mxu0 %v613
    %v809 = vpop.f32.mrb[0].mxu0
    %v810 = vadd.f32 %v638, %v809
    %v811 = vpop.f32.mrb[0].mxu0
    %v812 = vpop.f32.mrb[0].mxu0
    %v813 = vadd.f32 %v638, %v812
    %v814 = vpop.f32.mrb[0].mxu0
    %815 = vmatprep.mubr.bf16.mxu0 0
    %816 = vmatmul.mubr.bf16.gmra.mrb[0].mxu0 %v614
    %v817 = vpop.f32.mrb[0].mxu0
    %v818 = vadd.f32 %v638, %v817
    %v819 = vpop.f32.mrb[0].mxu0
    %v820 = vpop.f32.mrb[0].mxu0
    %v821 = vadd.f32 %v638, %v820
    %v822 = vpop.f32.mrb[0].mxu0
    %823 = vmatprep.mubr.bf16.mxu0 0
    %824 = vmatmul.mubr.bf16.gmra.mrb[0].mxu0 %v615
    %v825 = vpop.f32.mrb[0].mxu0
    %v826 = vadd.f32 %v638, %v825
    %v827 = vpop.f32.mrb[0].mxu0
    %v828 = vpop.f32.mrb[0].mxu0
    %v829 = vadd.f32 %v638, %v828
    %v830 = vpop.f32.mrb[0].mxu0
    %831 = vmatprep.mubr.bf16.mxu0 0
    %832 = vmatmul.mubr.bf16.gmra.mrb[0].mxu0 %v616
    %v833 = vpop.f32.mrb[0].mxu0
    %v834 = vadd.f32 %v638, %v833
    %v835 = vpop.f32.mrb[0].mxu0
    %v836 = vpop.f32.mrb[0].mxu0
    %v837 = vadd.f32 %v638, %v836
    %v838 = vpop.f32.mrb[0].mxu0
    %839 = vmatprep.mubr.bf16.mxu0 0
    %840 = vmatmul.mubr.bf16.gmra.mrb[0].mxu0 %v617
    %v841 = vpop.f32.mrb[0].mxu0
    %v842 = vadd.f32 %v638, %v841
    %v843 = vpop.f32.mrb[0].mxu0
    %v844 = vpop.f32.mrb[0].mxu0
    %v845 = vadd.f32 %v638, %v844
    %v846 = vpop.f32.mrb[0].mxu0
    %847 = vdwg.mxu0
    %v848 = vmax.f32 %v722, 0.0
    %v849 = vmax.f32 %v725, 0.0
    %v850 = vmax.f32 %v730, 0.0
    %v851 = vmax.f32 %v733, 0.0
    %v852 = vmax.f32 %v738, 0.0
    %v853 = vmax.f32 %v741, 0.0
    %v854 = vmax.f32 %v746, 0.0
    %v855 = vmax.f32 %v749, 0.0
    %v856 = vmax.f32 %v754, 0.0
    %v857 = vmax.f32 %v757, 0.0
    %v858 = vmax.f32 %v762, 0.0
    %v859 = vmax.f32 %v765, 0.0
    %v860 = vmax.f32 %v770, 0.0
    %v861 = vmax.f32 %v773, 0.0
    %v862 = vmax.f32 %v778, 0.0
    %v863 = vmax.f32 %v781, 0.0
    %v864 = vmax.f32 %v786, 0.0
    %v865 = vmax.f32 %v789, 0.0
    %v866 = vmax.f32 %v794, 0.0
    %v867 = vmax.f32 %v797, 0.0
    %v868 = vmax.f32 %v802, 0.0
    %v869 = vmax.f32 %v805, 0.0
    %v870 = vmax.f32 %v810, 0.0
    %v871 = vmax.f32 %v813, 0.0
    %v872 = vmax.f32 %v818, 0.0
    %v873 = vmax.f32 %v821, 0.0
    %v874 = vmax.f32 %v826, 0.0
    %v875 = vmax.f32 %v829, 0.0
    %v876 = vmax.f32 %v834, 0.0
    %v877 = vmax.f32 %v837, 0.0
    %v878 = vmax.f32 %v842, 0.0
    %v879 = vmax.f32 %v845, 0.0
    %v880 = vpack.c.bf16 %v849, %v848
    %v881 = vpack.c.bf16 %v851, %v850
    %v882 = vpack.c.bf16 %v853, %v852
    %v883 = vpack.c.bf16 %v855, %v854
    %v884 = vpack.c.bf16 %v857, %v856
    %v885 = vpack.c.bf16 %v859, %v858
    %v886 = vpack.c.bf16 %v861, %v860
    %v887 = vpack.c.bf16 %v863, %v862
    %v888 = vpack.c.bf16 %v865, %v864
    %v889 = vpack.c.bf16 %v867, %v866
    %v890 = vpack.c.bf16 %v869, %v868
    %v891 = vpack.c.bf16 %v871, %v870
    %v892 = vpack.c.bf16 %v873, %v872
    %v893 = vpack.c.bf16 %v875, %v874
    %v894 = vpack.c.bf16 %v877, %v876
    %v895 = vpack.c.bf16 %v879, %v878
    %s896 = scalar_lea.vmem %s2, 128
    %v897 = vld [vmem:[%s896] sm:$0xf]
    %v898 = vld [vmem:[%s896 + $0x4] sm:$0xf]
    %v899 = vld [vmem:[%s896 + $0x8] sm:$0xf]
    %v900 = vld [vmem:[%s896 + $0xc] sm:$0xf]
    %v901 = vld [vmem:[%s896 + $0x10] sm:$0xf]
    %v902 = vld [vmem:[%s896 + $0x14] sm:$0xf]
    %v903 = vld [vmem:[%s896 + $0x18] sm:$0xf]
    %v904 = vld [vmem:[%s896 + $0x1c] sm:$0xf]
    %v905 = vld [vmem:[%s896 + $0x20] sm:$0xf]
    %v906 = vld [vmem:[%s896 + $0x24] sm:$0xf]
    %v907 = vld [vmem:[%s896 + $0x28] sm:$0xf]
    %v908 = vld [vmem:[%s896 + $0x2c] sm:$0xf]
    %v909 = vld [vmem:[%s896 + $0x30] sm:$0xf]
    %v910 = vld [vmem:[%s896 + $0x34] sm:$0xf]
    %v911 = vld [vmem:[%s896 + $0x38] sm:$0xf]
    %v912 = vld [vmem:[%s896 + $0x3c] sm:$0xf]
    %v913 = vlaneseq
    %v914 = vshrl.u32 %v913, 7
    %v915 = vsub.s32 3, %v914
    %v916 = vrot.slane %v25, %v915
    %v933 = vunpack.c.l.b16 %v897
    %v934 = vunpack.c.l.b16 %v898
    %v935 = vunpack.c.l.b16 %v899
    %v936 = vunpack.c.l.b16 %v900
    %v937 = vunpack.c.l.b16 %v901
    %v938 = vunpack.c.l.b16 %v902
    %v939 = vunpack.c.l.b16 %v903
    %v940 = vunpack.c.l.b16 %v904
    %v941 = vunpack.c.l.b16 %v905
    %v942 = vunpack.c.l.b16 %v906
    %v943 = vunpack.c.l.b16 %v907
    %v944 = vunpack.c.l.b16 %v908
    %v945 = vunpack.c.l.b16 %v909
    %v946 = vunpack.c.l.b16 %v910
    %v947 = vunpack.c.l.b16 %v911
    %v948 = vunpack.c.l.b16 %v912
    %v949 = vpack.c.b16 %v934, %v933
    %v950 = vpack.c.b16 %v936, %v935
    %v951 = vpack.c.b16 %v938, %v937
    %v952 = vpack.c.b16 %v940, %v939
    %v953 = vpack.c.b16 %v942, %v941
    %v954 = vpack.c.b16 %v944, %v943
    %v955 = vpack.c.b16 %v946, %v945
    %v956 = vpack.c.b16 %v948, %v947
    %965 = vmatprep.subr.bf16.mxu0 0
    %966 = vmatpush1.bf16.msra.mxu0 %v949
    %967 = vmatprep.subr.bf16.mxu0 0
    %968 = vmatpush1.bf16.msra.mxu0 %v950
    %969 = vmatprep.subr.bf16.mxu0 0
    %970 = vmatpush1.bf16.msra.mxu0 %v951
    %971 = vmatprep.subr.bf16.mxu0 0
    %972 = vmatpush1.bf16.msra.mxu0 %v952
    %973 = vmatprep.subr.bf16.mxu0 0
    %974 = vmatpush1.bf16.msra.mxu0 %v953
    %975 = vmatprep.subr.bf16.mxu0 0
    %976 = vmatpush1.bf16.msra.mxu0 %v954
    %977 = vmatprep.subr.bf16.mxu0 0
    %978 = vmatpush1.bf16.msra.mxu0 %v955
    %979 = vmatprep.subr.bf16.mxu0 0
    %980 = vmatpush1.bf16.msra.mxu0 %v956
    %981 = vmatprep.subr.bf16.mxu0 0
    %982 = vmatpush1.bf16.msra.mxu0 0
    %983 = vmatprep.subr.bf16.mxu0 0
    %984 = vmatpush1.bf16.msra.mxu0 0
    %985 = vmatprep.subr.bf16.mxu0 0
    %986 = vmatpush1.bf16.msra.mxu0 0
    %987 = vmatprep.subr.bf16.mxu0 0
    %988 = vmatpush1.bf16.msra.mxu0 0
    %989 = vmatprep.subr.bf16.mxu0 0
    %990 = vmatpush1.bf16.msra.mxu0 0
    %991 = vmatprep.subr.bf16.mxu0 0
    %992 = vmatpush1.bf16.msra.mxu0 0
    %993 = vmatprep.subr.bf16.mxu0 0
    %994 = vmatpush1.bf16.msra.mxu0 0
    %995 = vmatprep.subr.bf16.mxu0 0
    %996 = vmatpush1.bf16.msra.mxu0 0
    %997 = vmatprep.mubr.bf16.mxu0 0
    %998 = vmatmul.mubr.bf16.gmra.mrb[0].mxu0 %v880
    %v999 = vpop.f32.mrb[0].mxu0
    %v1000 = vadd.f32 %v916, %v999
    %v1001 = vpop.f32.mrb[0].mxu0
    %v1002 = vpop.f32.mrb[0].mxu0
    %v1003 = vadd.f32 %v916, %v1002
    %v1004 = vpop.f32.mrb[0].mxu0
    %1005 = vmatprep.mubr.bf16.mxu0 0
    %1006 = vmatmul.mubr.bf16.gmra.mrb[0].mxu0 %v881
    %v1007 = vpop.f32.mrb[0].mxu0
    %v1008 = vadd.f32 %v916, %v1007
    %v1009 = vpop.f32.mrb[0].mxu0
    %v1010 = vpop.f32.mrb[0].mxu0
    %v1011 = vadd.f32 %v916, %v1010
    %v1012 = vpop.f32.mrb[0].mxu0
    %1013 = vmatprep.mubr.bf16.mxu0 0
    %1014 = vmatmul.mubr.bf16.gmra.mrb[0].mxu0 %v882
    %v1015 = vpop.f32.mrb[0].mxu0
    %v1016 = vadd.f32 %v916, %v1015
    %v1017 = vpop.f32.mrb[0].mxu0
    %v1018 = vpop.f32.mrb[0].mxu0
    %v1019 = vadd.f32 %v916, %v1018
    %v1020 = vpop.f32.mrb[0].mxu0
    %1021 = vmatprep.mubr.bf16.mxu0 0
    %1022 = vmatmul.mubr.bf16.gmra.mrb[0].mxu0 %v883
    %v1023 = vpop.f32.mrb[0].mxu0
    %v1024 = vadd.f32 %v916, %v1023
    %v1025 = vpop.f32.mrb[0].mxu0
    %v1026 = vpop.f32.mrb[0].mxu0
    %v1027 = vadd.f32 %v916, %v1026
    %v1028 = vpop.f32.mrb[0].mxu0
    %1029 = vmatprep.mubr.bf16.mxu0 0
    %1030 = vmatmul.mubr.bf16.gmra.mrb[0].mxu0 %v884
    %v1031 = vpop.f32.mrb[0].mxu0
    %v1032 = vadd.f32 %v916, %v1031
    %v1033 = vpop.f32.mrb[0].mxu0
    %v1034 = vpop.f32.mrb[0].mxu0
    %v1035 = vadd.f32 %v916, %v1034
    %v1036 = vpop.f32.mrb[0].mxu0
    %1037 = vmatprep.mubr.bf16.mxu0 0
    %1038 = vmatmul.mubr.bf16.gmra.mrb[0].mxu0 %v885
    %v1039 = vpop.f32.mrb[0].mxu0
    %v1040 = vadd.f32 %v916, %v1039
    %v1041 = vpop.f32.mrb[0].mxu0
    %v1042 = vpop.f32.mrb[0].mxu0
    %v1043 = vadd.f32 %v916, %v1042
    %v1044 = vpop.f32.mrb[0].mxu0
    %1045 = vmatprep.mubr.bf16.mxu0 0
    %1046 = vmatmul.mubr.bf16.gmra.mrb[0].mxu0 %v886
    %v1047 = vpop.f32.mrb[0].mxu0
    %v1048 = vadd.f32 %v916, %v1047
    %v1049 = vpop.f32.mrb[0].mxu0
    %v1050 = vpop.f32.mrb[0].mxu0
    %v1051 = vadd.f32 %v916, %v1050
    %v1052 = vpop.f32.mrb[0].mxu0
    %1053 = vmatprep.mubr.bf16.mxu0 0
    %1054 = vmatmul.mubr.bf16.gmra.mrb[0].mxu0 %v887
    %v1055 = vpop.f32.mrb[0].mxu0
    %v1056 = vadd.f32 %v916, %v1055
    %v1057 = vpop.f32.mrb[0].mxu0
    %v1058 = vpop.f32.mrb[0].mxu0
    %v1059 = vadd.f32 %v916, %v1058
    %v1060 = vpop.f32.mrb[0].mxu0
    %1061 = vmatprep.mubr.bf16.mxu0 0
    %1062 = vmatmul.mubr.bf16.gmra.mrb[0].mxu0 %v888
    %v1063 = vpop.f32.mrb[0].mxu0
    %v1064 = vadd.f32 %v916, %v1063
    %v1065 = vpop.f32.mrb[0].mxu0
    %v1066 = vpop.f32.mrb[0].mxu0
    %v1067 = vadd.f32 %v916, %v1066
    %v1068 = vpop.f32.mrb[0].mxu0
    %1069 = vmatprep.mubr.bf16.mxu0 0
    %1070 = vmatmul.mubr.bf16.gmra.mrb[0].mxu0 %v889
    %v1071 = vpop.f32.mrb[0].mxu0
    %v1072 = vadd.f32 %v916, %v1071
    %v1073 = vpop.f32.mrb[0].mxu0
    %v1074 = vpop.f32.mrb[0].mxu0
    %v1075 = vadd.f32 %v916, %v1074
    %v1076 = vpop.f32.mrb[0].mxu0
    %1077 = vmatprep.mubr.bf16.mxu0 0
    %1078 = vmatmul.mubr.bf16.gmra.mrb[0].mxu0 %v890
    %v1079 = vpop.f32.mrb[0].mxu0
    %v1080 = vadd.f32 %v916, %v1079
    %v1081 = vpop.f32.mrb[0].mxu0
    %v1082 = vpop.f32.mrb[0].mxu0
    %v1083 = vadd.f32 %v916, %v1082
    %v1084 = vpop.f32.mrb[0].mxu0
    %1085 = vmatprep.mubr.bf16.mxu0 0
    %1086 = vmatmul.mubr.bf16.gmra.mrb[0].mxu0 %v891
    %v1087 = vpop.f32.mrb[0].mxu0
    %v1088 = vadd.f32 %v916, %v1087
    %v1089 = vpop.f32.mrb[0].mxu0
    %v1090 = vpop.f32.mrb[0].mxu0
    %v1091 = vadd.f32 %v916, %v1090
    %v1092 = vpop.f32.mrb[0].mxu0
    %1093 = vmatprep.mubr.bf16.mxu0 0
    %1094 = vmatmul.mubr.bf16.gmra.mrb[0].mxu0 %v892
    %v1095 = vpop.f32.mrb[0].mxu0
    %v1096 = vadd.f32 %v916, %v1095
    %v1097 = vpop.f32.mrb[0].mxu0
    %v1098 = vpop.f32.mrb[0].mxu0
    %v1099 = vadd.f32 %v916, %v1098
    %v1100 = vpop.f32.mrb[0].mxu0
    %1101 = vmatprep.mubr.bf16.mxu0 0
    %1102 = vmatmul.mubr.bf16.gmra.mrb[0].mxu0 %v893
    %v1103 = vpop.f32.mrb[0].mxu0
    %v1104 = vadd.f32 %v916, %v1103
    %v1105 = vpop.f32.mrb[0].mxu0
    %v1106 = vpop.f32.mrb[0].mxu0
    %v1107 = vadd.f32 %v916, %v1106
    %v1108 = vpop.f32.mrb[0].mxu0
    %1109 = vmatprep.mubr.bf16.mxu0 0
    %1110 = vmatmul.mubr.bf16.gmra.mrb[0].mxu0 %v894
    %v1111 = vpop.f32.mrb[0].mxu0
    %v1112 = vadd.f32 %v916, %v1111
    %v1113 = vpop.f32.mrb[0].mxu0
    %v1114 = vpop.f32.mrb[0].mxu0
    %v1115 = vadd.f32 %v916, %v1114
    %v1116 = vpop.f32.mrb[0].mxu0
    %1117 = vmatprep.mubr.bf16.mxu0 0
    %1118 = vmatmul.mubr.bf16.gmra.mrb[0].mxu0 %v895
    %v1119 = vpop.f32.mrb[0].mxu0
    %v1120 = vadd.f32 %v916, %v1119
    %v1121 = vpop.f32.mrb[0].mxu0
    %v1122 = vpop.f32.mrb[0].mxu0
    %v1123 = vadd.f32 %v916, %v1122
    %v1124 = vpop.f32.mrb[0].mxu0
    %1125 = vdwg.mxu0
    %v1126 = vmax.f32 %v1000, 0.0
    %v1127 = vmax.f32 %v1003, 0.0
    %v1128 = vmax.f32 %v1008, 0.0
    %v1129 = vmax.f32 %v1011, 0.0
    %v1130 = vmax.f32 %v1016, 0.0
    %v1131 = vmax.f32 %v1019, 0.0
    %v1132 = vmax.f32 %v1024, 0.0
    %v1133 = vmax.f32 %v1027, 0.0
    %v1134 = vmax.f32 %v1032, 0.0
    %v1135 = vmax.f32 %v1035, 0.0
    %v1136 = vmax.f32 %v1040, 0.0
    %v1137 = vmax.f32 %v1043, 0.0
    %v1138 = vmax.f32 %v1048, 0.0
    %v1139 = vmax.f32 %v1051, 0.0
    %v1140 = vmax.f32 %v1056, 0.0
    %v1141 = vmax.f32 %v1059, 0.0
    %v1142 = vmax.f32 %v1064, 0.0
    %v1143 = vmax.f32 %v1067, 0.0
    %v1144 = vmax.f32 %v1072, 0.0
    %v1145 = vmax.f32 %v1075, 0.0
    %v1146 = vmax.f32 %v1080, 0.0
    %v1147 = vmax.f32 %v1083, 0.0
    %v1148 = vmax.f32 %v1088, 0.0
    %v1149 = vmax.f32 %v1091, 0.0
    %v1150 = vmax.f32 %v1096, 0.0
    %v1151 = vmax.f32 %v1099, 0.0
    %v1152 = vmax.f32 %v1104, 0.0
    %v1153 = vmax.f32 %v1107, 0.0
    %v1154 = vmax.f32 %v1112, 0.0
    %v1155 = vmax.f32 %v1115, 0.0
    %v1156 = vmax.f32 %v1120, 0.0
    %v1157 = vmax.f32 %v1123, 0.0
    %v1158 = vpack.c.bf16 %v1127, %v1126
    %v1159 = vpack.c.bf16 %v1129, %v1128
    %v1160 = vpack.c.bf16 %v1131, %v1130
    %v1161 = vpack.c.bf16 %v1133, %v1132
    %v1162 = vpack.c.bf16 %v1135, %v1134
    %v1163 = vpack.c.bf16 %v1137, %v1136
    %v1164 = vpack.c.bf16 %v1139, %v1138
    %v1165 = vpack.c.bf16 %v1141, %v1140
    %v1166 = vpack.c.bf16 %v1143, %v1142
    %v1167 = vpack.c.bf16 %v1145, %v1144
    %v1168 = vpack.c.bf16 %v1147, %v1146
    %v1169 = vpack.c.bf16 %v1149, %v1148
    %v1170 = vpack.c.bf16 %v1151, %v1150
    %v1171 = vpack.c.bf16 %v1153, %v1152
    %v1172 = vpack.c.bf16 %v1155, %v1154
    %v1173 = vpack.c.bf16 %v1157, %v1156
    %v1174 = vld [vmem:[%s4] sm:$0xf]
    %v1175 = vld [vmem:[%s4 + $0x4] sm:$0xf]
    %v1176 = vld [vmem:[%s4 + $0x8] sm:$0xf]
    %v1177 = vld [vmem:[%s4 + $0xc] sm:$0xf]
    %v1178 = vld [vmem:[%s4 + $0x10] sm:$0xf]
    %v1179 = vld [vmem:[%s4 + $0x14] sm:$0xf]
    %v1180 = vld [vmem:[%s4 + $0x18] sm:$0xf]
    %v1181 = vld [vmem:[%s4 + $0x1c] sm:$0xf]
    %v1182 = vld [vmem:[%s4 + $0x20] sm:$0xf]
    %v1183 = vld [vmem:[%s4 + $0x24] sm:$0xf]
    %v1184 = vld [vmem:[%s4 + $0x28] sm:$0xf]
    %v1185 = vld [vmem:[%s4 + $0x2c] sm:$0xf]
    %v1186 = vld [vmem:[%s4 + $0x30] sm:$0xf]
    %v1187 = vld [vmem:[%s4 + $0x34] sm:$0xf]
    %v1188 = vld [vmem:[%s4 + $0x38] sm:$0xf]
    %v1189 = vld [vmem:[%s4 + $0x3c] sm:$0xf]
    %v1190 = vld [vmem:[%s5] sm:$0x1]
    %v1192 = vlaneseq
    %v1193 = vshrl.u32 %v1192, 7
    %v1194 = vsub.s32 0, %v1193
    %v1195 = vrot.slane %v1190, %v1194
    %v1213 = vunpack.c.l.b16 %v1174
    %v1214 = vunpack.c.l.b16 %v1175
    %v1215 = vunpack.c.l.b16 %v1176
    %v1216 = vunpack.c.l.b16 %v1177
    %v1217 = vunpack.c.l.b16 %v1178
    %v1218 = vunpack.c.l.b16 %v1179
    %v1219 = vunpack.c.l.b16 %v1180
    %v1220 = vunpack.c.l.b16 %v1181
    %v1221 = vunpack.c.l.b16 %v1182
    %v1222 = vunpack.c.l.b16 %v1183
    %v1223 = vunpack.c.l.b16 %v1184
    %v1224 = vunpack.c.l.b16 %v1185
    %v1225 = vunpack.c.l.b16 %v1186
    %v1226 = vunpack.c.l.b16 %v1187
    %v1227 = vunpack.c.l.b16 %v1188
    %v1228 = vunpack.c.l.b16 %v1189
    %v1229 = vpack.c.b16 %v1214, %v1213
    %v1230 = vpack.c.b16 %v1216, %v1215
    %v1231 = vpack.c.b16 %v1218, %v1217
    %v1232 = vpack.c.b16 %v1220, %v1219
    %v1233 = vpack.c.b16 %v1222, %v1221
    %v1234 = vpack.c.b16 %v1224, %v1223
    %v1235 = vpack.c.b16 %v1226, %v1225
    %v1236 = vpack.c.b16 %v1228, %v1227
    %1245 = vmatprep.subr.bf16.mxu0 0
    %1246 = vmatpush1.bf16.msra.mxu0 %v1229
    %1247 = vmatprep.subr.bf16.mxu0 0
    %1248 = vmatpush1.bf16.msra.mxu0 %v1230
    %1249 = vmatprep.subr.bf16.mxu0 0
    %1250 = vmatpush1.bf16.msra.mxu0 %v1231
    %1251 = vmatprep.subr.bf16.mxu0 0
    %1252 = vmatpush1.bf16.msra.mxu0 %v1232
    %1253 = vmatprep.subr.bf16.mxu0 0
    %1254 = vmatpush1.bf16.msra.mxu0 %v1233
    %1255 = vmatprep.subr.bf16.mxu0 0
    %1256 = vmatpush1.bf16.msra.mxu0 %v1234
    %1257 = vmatprep.subr.bf16.mxu0 0
    %1258 = vmatpush1.bf16.msra.mxu0 %v1235
    %1259 = vmatprep.subr.bf16.mxu0 0
    %1260 = vmatpush1.bf16.msra.mxu0 %v1236
    %1261 = vmatprep.subr.bf16.mxu0 0
    %1262 = vmatpush1.bf16.msra.mxu0 0
    %1263 = vmatprep.subr.bf16.mxu0 0
    %1264 = vmatpush1.bf16.msra.mxu0 0
    %1265 = vmatprep.subr.bf16.mxu0 0
    %1266 = vmatpush1.bf16.msra.mxu0 0
    %1267 = vmatprep.subr.bf16.mxu0 0
    %1268 = vmatpush1.bf16.msra.mxu0 0
    %1269 = vmatprep.subr.bf16.mxu0 0
    %1270 = vmatpush1.bf16.msra.mxu0 0
    %1271 = vmatprep.subr.bf16.mxu0 0
    %1272 = vmatpush1.bf16.msra.mxu0 0
    %1273 = vmatprep.subr.bf16.mxu0 0
    %1274 = vmatpush1.bf16.msra.mxu0 0
    %1275 = vmatprep.subr.bf16.mxu0 0
    %1276 = vmatpush1.bf16.msra.mxu0 0
    %1277 = vmatprep.mubr.bf16.mxu0 0
    %1278 = vmatmul.mubr.bf16.gmra.mrb[0].mxu0 %v1158
    %v1279 = vpop.f32.mrb[0].mxu0
    %v1280 = vadd.f32 %v1195, %v1279
    %v1281 = vpop.f32.mrb[0].mxu0
    %v1282 = vpop.f32.mrb[0].mxu0
    %v1283 = vadd.f32 %v1195, %v1282
    %v1284 = vpop.f32.mrb[0].mxu0
    %1285 = vmatprep.mubr.bf16.mxu0 0
    %1286 = vmatmul.mubr.bf16.gmra.mrb[0].mxu0 %v1159
    %v1287 = vpop.f32.mrb[0].mxu0
    %v1288 = vadd.f32 %v1195, %v1287
    %v1289 = vpop.f32.mrb[0].mxu0
    %v1290 = vpop.f32.mrb[0].mxu0
    %v1291 = vadd.f32 %v1195, %v1290
    %v1292 = vpop.f32.mrb[0].mxu0
    %1293 = vmatprep.mubr.bf16.mxu0 0
    %1294 = vmatmul.mubr.bf16.gmra.mrb[0].mxu0 %v1160
    %v1295 = vpop.f32.mrb[0].mxu0
    %v1296 = vadd.f32 %v1195, %v1295
    %v1297 = vpop.f32.mrb[0].mxu0
    %v1298 = vpop.f32.mrb[0].mxu0
    %v1299 = vadd.f32 %v1195, %v1298
    %v1300 = vpop.f32.mrb[0].mxu0
    %1301 = vmatprep.mubr.bf16.mxu0 0
    %1302 = vmatmul.mubr.bf16.gmra.mrb[0].mxu0 %v1161
    %v1303 = vpop.f32.mrb[0].mxu0
    %v1304 = vadd.f32 %v1195, %v1303
    %v1305 = vpop.f32.mrb[0].mxu0
    %v1306 = vpop.f32.mrb[0].mxu0
    %v1307 = vadd.f32 %v1195, %v1306
    %v1308 = vpop.f32.mrb[0].mxu0
    %1309 = vmatprep.mubr.bf16.mxu0 0
    %1310 = vmatmul.mubr.bf16.gmra.mrb[0].mxu0 %v1162
    %v1311 = vpop.f32.mrb[0].mxu0
    %v1312 = vadd.f32 %v1195, %v1311
    %v1313 = vpop.f32.mrb[0].mxu0
    %v1314 = vpop.f32.mrb[0].mxu0
    %v1315 = vadd.f32 %v1195, %v1314
    %v1316 = vpop.f32.mrb[0].mxu0
    %1317 = vmatprep.mubr.bf16.mxu0 0
    %1318 = vmatmul.mubr.bf16.gmra.mrb[0].mxu0 %v1163
    %v1319 = vpop.f32.mrb[0].mxu0
    %v1320 = vadd.f32 %v1195, %v1319
    %v1321 = vpop.f32.mrb[0].mxu0
    %v1322 = vpop.f32.mrb[0].mxu0
    %v1323 = vadd.f32 %v1195, %v1322
    %v1324 = vpop.f32.mrb[0].mxu0
    %1325 = vmatprep.mubr.bf16.mxu0 0
    %1326 = vmatmul.mubr.bf16.gmra.mrb[0].mxu0 %v1164
    %v1327 = vpop.f32.mrb[0].mxu0
    %v1328 = vadd.f32 %v1195, %v1327
    %v1329 = vpop.f32.mrb[0].mxu0
    %v1330 = vpop.f32.mrb[0].mxu0
    %v1331 = vadd.f32 %v1195, %v1330
    %v1332 = vpop.f32.mrb[0].mxu0
    %1333 = vmatprep.mubr.bf16.mxu0 0
    %1334 = vmatmul.mubr.bf16.gmra.mrb[0].mxu0 %v1165
    %v1335 = vpop.f32.mrb[0].mxu0
    %v1336 = vadd.f32 %v1195, %v1335
    %v1337 = vpop.f32.mrb[0].mxu0
    %v1338 = vpop.f32.mrb[0].mxu0
    %v1339 = vadd.f32 %v1195, %v1338
    %v1340 = vpop.f32.mrb[0].mxu0
    %1341 = vmatprep.mubr.bf16.mxu0 0
    %1342 = vmatmul.mubr.bf16.gmra.mrb[0].mxu0 %v1166
    %v1343 = vpop.f32.mrb[0].mxu0
    %v1344 = vadd.f32 %v1195, %v1343
    %v1345 = vpop.f32.mrb[0].mxu0
    %v1346 = vpop.f32.mrb[0].mxu0
    %v1347 = vadd.f32 %v1195, %v1346
    %v1348 = vpop.f32.mrb[0].mxu0
    %1349 = vmatprep.mubr.bf16.mxu0 0
    %1350 = vmatmul.mubr.bf16.gmra.mrb[0].mxu0 %v1167
    %v1351 = vpop.f32.mrb[0].mxu0
    %v1352 = vadd.f32 %v1195, %v1351
    %v1353 = vpop.f32.mrb[0].mxu0
    %v1354 = vpop.f32.mrb[0].mxu0
    %v1355 = vadd.f32 %v1195, %v1354
    %v1356 = vpop.f32.mrb[0].mxu0
    %1357 = vmatprep.mubr.bf16.mxu0 0
    %1358 = vmatmul.mubr.bf16.gmra.mrb[0].mxu0 %v1168
    %v1359 = vpop.f32.mrb[0].mxu0
    %v1360 = vadd.f32 %v1195, %v1359
    %v1361 = vpop.f32.mrb[0].mxu0
    %v1362 = vpop.f32.mrb[0].mxu0
    %v1363 = vadd.f32 %v1195, %v1362
    %v1364 = vpop.f32.mrb[0].mxu0
    %1365 = vmatprep.mubr.bf16.mxu0 0
    %1366 = vmatmul.mubr.bf16.gmra.mrb[0].mxu0 %v1169
    %v1367 = vpop.f32.mrb[0].mxu0
    %v1368 = vadd.f32 %v1195, %v1367
    %v1369 = vpop.f32.mrb[0].mxu0
    %v1370 = vpop.f32.mrb[0].mxu0
    %v1371 = vadd.f32 %v1195, %v1370
    %v1372 = vpop.f32.mrb[0].mxu0
    %1373 = vmatprep.mubr.bf16.mxu0 0
    %1374 = vmatmul.mubr.bf16.gmra.mrb[0].mxu0 %v1170
    %v1375 = vpop.f32.mrb[0].mxu0
    %v1376 = vadd.f32 %v1195, %v1375
    %v1377 = vpop.f32.mrb[0].mxu0
    %v1378 = vpop.f32.mrb[0].mxu0
    %v1379 = vadd.f32 %v1195, %v1378
    %v1380 = vpop.f32.mrb[0].mxu0
    %1381 = vmatprep.mubr.bf16.mxu0 0
    %1382 = vmatmul.mubr.bf16.gmra.mrb[0].mxu0 %v1171
    %v1383 = vpop.f32.mrb[0].mxu0
    %v1384 = vadd.f32 %v1195, %v1383
    %v1385 = vpop.f32.mrb[0].mxu0
    %v1386 = vpop.f32.mrb[0].mxu0
    %v1387 = vadd.f32 %v1195, %v1386
    %v1388 = vpop.f32.mrb[0].mxu0
    %1389 = vmatprep.mubr.bf16.mxu0 0
    %1390 = vmatmul.mubr.bf16.gmra.mrb[0].mxu0 %v1172
    %v1391 = vpop.f32.mrb[0].mxu0
    %v1392 = vadd.f32 %v1195, %v1391
    %v1393 = vpop.f32.mrb[0].mxu0
    %v1394 = vpop.f32.mrb[0].mxu0
    %v1395 = vadd.f32 %v1195, %v1394
    %v1396 = vpop.f32.mrb[0].mxu0
    %1397 = vmatprep.mubr.bf16.mxu0 0
    %1398 = vmatmul.mubr.bf16.gmra.mrb[0].mxu0 %v1173
    %v1399 = vpop.f32.mrb[0].mxu0
    %v1400 = vadd.f32 %v1195, %v1399
    %v1401 = vpop.f32.mrb[0].mxu0
    %v1402 = vpop.f32.mrb[0].mxu0
    %v1403 = vadd.f32 %v1195, %v1402
    %v1404 = vpop.f32.mrb[0].mxu0
    %1405 = vdwg.mxu0
    %1406 = vst [vmem:[#allocation2] sm:$0xff] %v1280
    %1407 = vst [vmem:[#allocation2 + $0x8] sm:$0xff] %v1283
    %1408 = vst [vmem:[#allocation2 + $0x10] sm:$0xff] %v1288
    %1409 = vst [vmem:[#allocation2 + $0x18] sm:$0xff] %v1291
    %1410 = vst [vmem:[#allocation2 + $0x20] sm:$0xff] %v1296
    %1411 = vst [vmem:[#allocation2 + $0x28] sm:$0xff] %v1299
    %1412 = vst [vmem:[#allocation2 + $0x30] sm:$0xff] %v1304
    %1413 = vst [vmem:[#allocation2 + $0x38] sm:$0xff] %v1307
    %1414 = vst [vmem:[#allocation2 + $0x40] sm:$0xff] %v1312
    %1415 = vst [vmem:[#allocation2 + $0x48] sm:$0xff] %v1315
    %1416 = vst [vmem:[#allocation2 + $0x50] sm:$0xff] %v1320
    %1417 = vst [vmem:[#allocation2 + $0x58] sm:$0xff] %v1323
    %1418 = vst [vmem:[#allocation2 + $0x60] sm:$0xff] %v1328
    %1419 = vst [vmem:[#allocation2 + $0x68] sm:$0xff] %v1331
    %1420 = vst [vmem:[#allocation2 + $0x70] sm:$0xff] %v1336
    %1421 = vst [vmem:[#allocation2 + $0x78] sm:$0xff] %v1339
    %1422 = vst [vmem:[#allocation2 + $0x80] sm:$0xff] %v1344
    %1423 = vst [vmem:[#allocation2 + $0x88] sm:$0xff] %v1347
    %1424 = vst [vmem:[#allocation2 + $0x90] sm:$0xff] %v1352
    %1425 = vst [vmem:[#allocation2 + $0x98] sm:$0xff] %v1355
    %1426 = vst [vmem:[#allocation2 + $0xa0] sm:$0xff] %v1360
    %1427 = vst [vmem:[#allocation2 + $0xa8] sm:$0xff] %v1363
    %1428 = vst [vmem:[#allocation2 + $0xb0] sm:$0xff] %v1368
    %1429 = vst [vmem:[#allocation2 + $0xb8] sm:$0xff] %v1371
    %1430 = vst [vmem:[#allocation2 + $0xc0] sm:$0xff] %v1376
    %1431 = vst [vmem:[#allocation2 + $0xc8] sm:$0xff] %v1379
    %1432 = vst [vmem:[#allocation2 + $0xd0] sm:$0xff] %v1384
    %1433 = vst [vmem:[#allocation2 + $0xd8] sm:$0xff] %v1387
    %1434 = vst [vmem:[#allocation2 + $0xe0] sm:$0xff] %v1392
    %1435 = vst [vmem:[#allocation2 + $0xe8] sm:$0xff] %v1395
    %1436 = vst [vmem:[#allocation2 + $0xf0] sm:$0xff] %v1400
    %1437 = vst [vmem:[#allocation2 + $0xf8] sm:$0xff] %v1403
    // Predicated region
    $region26: #{tpu_custom_call.1} parent=1 // pred_check
      _
    $region27: #{tpu_custom_call.1} parent=1 // pred_check_branch
      %1439 = sbr.rel (0) target = $region29
    $region28: #{tpu_custom_call.1} parent=1 // pred_region
      %s1441 = ssub.s32 4096, 4096
      %1442 = vsyncadd [#allocation3], %s1441
      %s1443 = sshll.u32 [#allocation2], 4
      %s1444 = int_to_ptr.vmem [resolvable:$true] %s1443
      %1449 = dma.vmem_to_hbm [thread:$0]  %s1444, 4096, %s6, [#allocation3], 128, 128, 8
    $region29: #{tpu_custom_call.1} parent=1 // pred_fallthru
      _
    // Predicated region
    $region30: #{tpu_custom_call.1} parent=1 // pred_check
      _
    $region31: #{tpu_custom_call.1} parent=1 // pred_check_branch
      %1451 = sbr.rel (0) target = $region33
    $region32: #{tpu_custom_call.1} parent=1 // pred_region
      %1452 = dma.done [#allocation3], 4096
    $region33: #{tpu_custom_call.1} parent=1 // pred_fallthru
      _
    %1453 = vsyncpa [#allocation3], 1

</llo_original>
